<compile_context>
chip_gen: v5e
topology: v5e:2x2
jax: 0.10.0
libtpu: 0.0.40
codegen_flags: <defaults>
</compile_context>

<pallas_src>
import functools

import jax
import jax.numpy as jnp
from jax import lax
from jax.experimental import pallas as pl
from jax.experimental.pallas import tpu as pltpu


def _round_up(x, m):
    return (x + m - 1) // m * m


# ----------------------------------------------------------------------------- #
# Kernel
# ----------------------------------------------------------------------------- #
def _bigru_classifier_kernel(
    x_ref,      # (T, Bb, I)   time-major input block                          (bf16)
    wi_ref,     # (I, 3*HC)    gate-grouped cols [r | z | n], fwd lanes [0:H],
                #              bwd lanes [H:2H] inside each group              (bf16)
    bi_ref,     # (1, 3*HC)    folded biases: (b_ih+b_hh) for r/z, b_ih for n  (f32)
    whh_ref,    # (HC, 3*HC)   block-diagonal recurrent weights                (bf16)
    bhn_ref,    # (1, HC)      hidden bias of the n gate (gated by r)          (f32)
    fcw_ref,    # (HC, O_pad)  FC rows ordered for the [h_fwd | h_bwd] carry   (bf16)
    fcb_ref,    # (1, O_pad)                                                   (f32)
    out_ref,    # (Bb, O_pad)                                                  (f32)
    gi_ref,     # scratch (T*Bb, 3*HC) f32 — all input projections
    *, hidden_size,
):
    T, Bb, I = x_ref.shape
    HC = whh_ref.shape[0]
    GH = 3 * HC
    H = hidden_size

    # --- pre-loop: ALL input projections (all time steps, both directions' weight
    #     columns) in one MXU matmul, written to an explicit VMEM scratch so the
    #     hot recurrence only does clean per-step vlds (no giant live value / spills).
    x_all = x_ref[...].reshape(T * Bb, I)
    gi_ref[...] = (
        jnp.dot(x_all, wi_ref[...], preferred_element_type=jnp.float32)
        + bi_ref[...]
    )  # (T*Bb, 3*HC) f32

    whh = whh_ref[...]
    mm_dtype = whh.dtype
    bhn = jnp.broadcast_to(bhn_ref[...], (Bb, HC))   # hoisted (no per-iter broadcast)

    # Hoisted lane-select mask: within each HC-wide gate group, lanes [0:H] belong to
    # the forward direction (time index t), lanes [H:2H] to the backward direction
    # (time index T-1-t).  One VPU select per step replaces the old 2x x_aug traffic.
    lane = lax.broadcasted_iota(jnp.int32, (Bb, GH), 1)
    fwd_lane = (lane % HC) < H

    def step(t, h):
        if isinstance(t, int):                       # static (unrolled) path
            off_f = t * Bb
            off_b = (T - 1 - t) * Bb
        else:                                        # dynamic (fori_loop) path
            off_f = pl.multiple_of(t * Bb, Bb)
            off_b = pl.multiple_of((T - 1 - t) * Bb, Bb)
        gi_f = gi_ref[pl.ds(off_f, Bb), :]
        gi_b = gi_ref[pl.ds(off_b, Bb), :]
        gi = jnp.where(fwd_lane, gi_f, gi_b)         # fwd lanes from t, bwd from T-1-t

        # Only this direction-fused matmul is on the serial path.
        # NOTE: h.astype(bf16) compounds rounding over T; fine for small T, consider
        # an f32 operand (or stochastic rounding) for very long sequences.
        gh = jnp.dot(h.astype(mm_dtype), whh, preferred_element_type=jnp.float32)

        r = jax.nn.sigmoid(gi[:, 0:HC] + gh[:, 0:HC])
        z = jax.nn.sigmoid(gi[:, HC:2 * HC] + gh[:, HC:2 * HC])
        n = jnp.tanh(gi[:, 2 * HC:GH] + r * (gh[:, 2 * HC:GH] + bhn))
        return (1.0 - z) * n + z * h

    h0 = jnp.zeros((Bb, HC), jnp.float32)            # [h_fwd | h_bwd | pad]
    if T <= 16:
        # Small static T: full unroll lets the LLO scheduler hide EUP latency.
        h = h0
        for t in range(T):
            h = step(t, h)
    else:
        # Longer T: bound live ranges / code size with a lightly-unrolled fori_loop.
        h = lax.fori_loop(0, T, step, h0, unroll=2)

    # FC head (lane-dense: O padded to 128; fc rows reordered for [h_fwd | h_bwd]).
    out_ref[...] = (
        jnp.dot(h.astype(fcw_ref.dtype), fcw_ref[...],
                preferred_element_type=jnp.float32)
        + fcb_ref[...]
    )


# ----------------------------------------------------------------------------- #
# Weight preparation (torch layout -> fused, gate-grouped, lane-padded layout)
# ----------------------------------------------------------------------------- #
def _prepare_weights(params, matmul_dtype):
    w_ih_f, w_hh_f = params["weight_ih_l0"], params["weight_hh_l0"]        # (3H,I),(3H,H)
    b_ih_f, b_hh_f = params["bias_ih_l0"], params["bias_hh_l0"]            # (3H,)
    w_ih_b, w_hh_b = params["weight_ih_l0_reverse"], params["weight_hh_l0_reverse"]
    b_ih_b, b_hh_b = params["bias_ih_l0_reverse"], params["bias_hh_l0_reverse"]
    fc_w, fc_b = params["fc_weight"], params["fc_bias"]                    # (O,2H),(O,)

    three_h, I = w_ih_f.shape
    H = three_h // 3
    O = fc_w.shape[0]
    HC = _round_up(2 * H, 128)     # per-gate group width, lane (128) aligned
    O_pad = _round_up(O, 128)      # lane-dense classifier output

    def split(a):                  # torch gate order: rows [r; z; n]
        return a[0:H], a[H:2 * H], a[2 * H:3 * H]

    wif_r, wif_z, wif_n = split(w_ih_f)
    wib_r, wib_z, wib_n = split(w_ih_b)
    whf_r, whf_z, whf_n = split(w_hh_f)
    whb_r, whb_z, whb_n = split(w_hh_b)
    bif_r, bif_z, bif_n = split(b_ih_f)
    bib_r, bib_z, bib_n = split(b_ih_b)
    bhf_r, bhf_z, bhf_n = split(b_hh_f)
    bhb_r, bhb_z, bhb_n = split(b_hh_b)

    def wi_group(wf_g, wb_g):
        # x (T,B,I) is fed once; fwd weights go to lanes [0:H], bwd to [H:2H].
        blk = jnp.zeros((I, HC), jnp.float32)
        blk = blk.at[:, 0:H].set(wf_g.T)
        blk = blk.at[:, H:2 * H].set(wb_g.T)
        return blk

    def wh_group(wf_g, wb_g):
        # block diagonal: carry layout is [h_fwd | h_bwd | pad]
        blk = jnp.zeros((HC, HC), jnp.float32)
        blk = blk.at[0:H, 0:H].set(wf_g.T)
        blk = blk.at[H:2 * H, H:2 * H].set(wb_g.T)
        return blk

    def b_group(bf_g, bb_g):
        b = jnp.zeros((HC,), jnp.float32)
        b = b.at[0:H].set(bf_g)
        b = b.at[H:2 * H].set(bb_g)
        return b

    w_i = jnp.concatenate([wi_group(wif_r, wib_r),
                           wi_group(wif_z, wib_z),
                           wi_group(wif_n, wib_n)], axis=1)                # (I, 3*HC)
    w_h = jnp.concatenate([wh_group(whf_r, whb_r),
                           wh_group(whf_z, whb_z),
                           wh_group(whf_n, whb_n)], axis=1)                # (HC, 3*HC)
    # fold input+hidden biases for r/z; only the input bias for n (its hidden bias
    # is gated by r and must stay separate).
    b_i = jnp.concatenate([b_group(bif_r + bhf_r, bib_r + bhb_r),
                           b_group(bif_z + bhf_z, bib_z + bhb_z),
                           b_group(bif_n, bib_n)])[None, :]                # (1, 3*HC)
    b_hn = b_group(bhf_n, bhb_n)[None, :]                                  # (1, HC)

    # FC head: module does cat([hidden[-1], hidden[-2]]) = [h_bwd, h_fwd]; the kernel
    # carry is [h_fwd | h_bwd | pad] -> swap the FC weight row halves accordingly.
    # Columns zero-padded to O_pad=128 so the output store/DMA is lane-dense.
    fc_w_t = fc_w.T                                                        # (2H, O)
    fcw = jnp.zeros((HC, O_pad), jnp.float32)
    fcw = fcw.at[0:H, 0:O].set(fc_w_t[H:2 * H, :])   # rows multiplying h_fwd
    fcw = fcw.at[H:2 * H, 0:O].set(fc_w_t[0:H, :])   # rows multiplying h_bwd
    fcb = jnp.zeros((1, O_pad), jnp.float32).at[0, 0:O].set(fc_b)          # (1, O_pad)

    return (w_i.astype(matmul_dtype), b_i, w_h.astype(matmul_dtype),
            b_hn, fcw.astype(matmul_dtype), fcb, H, HC, O, O_pad)


# ----------------------------------------------------------------------------- #
# Wrapper
# ----------------------------------------------------------------------------- #
def rnn_classifier_forward(x_bsd, params, *, matmul_dtype=jnp.bfloat16):
    """x_bsd: (batch, seq, input_size) float32 — same layout as the batch_first module."""
    B, T, I = x_bsd.shape
    (w_i, b_i, w_h, b_hn, fcw, fcb, H, HC, O, O_pad) = _prepare_weights(
        params, matmul_dtype)

    # Batch blocking: >=2 programs whenever B >= 16 so both v7x TensorCores get
    # work (grid axis is "parallel"); blocks capped at 128 rows (good MXU M-fill
    # on single-TC v5e/v6e without blowing VMEM).
    B8 = _round_up(B, 8)
    if B8 >= 16:
        b_block = min(128, max(8, _round_up(B8 // 2, 8)))
    else:
        b_block = B8

    # Per-program VMEM residency budget (v7x has only 64 MiB physical VMEM).
    def vmem_est(bb):
        x_blk = 2 * T * bb * I * 2                                  # bf16 x, dbl-buffered
        gi = T * bb * 3 * HC * 4                                    # f32 gi scratch
        w = 2 * ((I * 3 * HC + HC * 3 * HC + HC * O_pad) * 2
                 + (3 * HC + HC + O_pad) * 4)                       # weights + biases
        out = 2 * bb * O_pad * 4
        return x_blk + gi + w + out

    VMEM_BUDGET = 48 << 20
    while b_block > 8 and vmem_est(b_block) > VMEM_BUDGET:
        b_block = max(8, _round_up(b_block // 2, 8))
    B_pad = _round_up(B, b_block)
    # TODO(synk): for very long T, chunk the pre-loop projection over T inside the
    # kernel (project a T-chunk, run its recurrence slice) instead of shrinking
    # b_block, to keep MXU M-fill on v7x's 64 MiB VMEM.
    vmem_limit = int(max(32 << 20, min(64 << 20, 2 * vmem_est(b_block))))

    # Time-major input, padded batch, bf16 MXU operand. No x_aug: the backward
    # direction is handled by static/dynamic index T-1-t inside the kernel.
    x_tbd = jnp.transpose(x_bsd, (1, 0, 2))                      # (T, B, I)
    if B_pad != B:
        x_tbd = jnp.pad(x_tbd, ((0, 0), (0, B_pad - B), (0, 0)))
    x_tbd = x_tbd.astype(matmul_dtype)

    kernel = functools.partial(_bigru_classifier_kernel, hidden_size=H)

    out = pl.pallas_call(
        kernel,
        out_shape=jax.ShapeDtypeStruct((B_pad, O_pad), jnp.float32),
        grid=(B_pad // b_block,),
        in_specs=[
            pl.BlockSpec((T, b_block, I), lambda i: (0, i, 0)),   # x (batch-blocked)
            pl.BlockSpec((I, 3 * HC), lambda i: (0, 0)),          # w_i
            pl.BlockSpec((1, 3 * HC), lambda i: (0, 0)),          # b_i (folded)
            pl.BlockSpec((HC, 3 * HC), lambda i: (0, 0)),         # w_hh (block-diag)
            pl.BlockSpec((1, HC), lambda i: (0, 0)),              # b_hh_n
            pl.BlockSpec((HC, O_pad), lambda i: (0, 0)),          # fc_w (lane-padded)
            pl.BlockSpec((1, O_pad), lambda i: (0, 0)),           # fc_b
        ],
        out_specs=pl.BlockSpec((b_block, O_pad), lambda i: (i, 0)),
        scratch_shapes=[pltpu.VMEM((T * b_block, 3 * HC), jnp.float32)],
        compiler_params=pltpu.CompilerParams(
            dimension_semantics=("parallel",),
            vmem_limit_bytes=vmem_limit),
    )(x_tbd, w_i, b_i, w_h, b_hn, fcw, fcb)
    return out[:B, :O]


# ----------------------------------------------------------------------------- #
# Pure-JAX f32 reference (direct transcription of the PyTorch module, eval mode)
# ----------------------------------------------------------------------------- #
def rnn_classifier_reference(x_bsd, params):
    B, T, I = x_bsd.shape
    H = params["weight_hh_l0"].shape[1]

    def gru_dir(x_tbi, w_ih, w_hh, b_ih, b_hh):
        def cell(h, x_t):
            gi = x_t @ w_ih.T + b_ih
            gh = h @ w_hh.T + b_hh
            r = jax.nn.sigmoid(gi[:, 0:H] + gh[:, 0:H])
            z = jax.nn.sigmoid(gi[:, H:2 * H] + gh[:, H:2 * H])
            n = jnp.tanh(gi[:, 2 * H:] + r * gh[:, 2 * H:])
            return (1.0 - z) * n + z * h, None
        h0 = jnp.zeros((B, H), jnp.float32)
        h_last, _ = lax.scan(cell, h0, x_tbi)
        return h_last

    x_tbi = jnp.transpose(x_bsd, (1, 0, 2))
    h_f = gru_dir(x_tbi, params["weight_ih_l0"], params["weight_hh_l0"],
                  params["bias_ih_l0"], params["bias_hh_l0"])
    h_b = gru_dir(x_tbi[::-1], params["weight_ih_l0_reverse"], params["weight_hh_l0_reverse"],
                  params["bias_ih_l0_reverse"], params["bias_hh_l0_reverse"])
    hidden_cat = jnp.concatenate([h_b, h_f], axis=1)   # torch.cat([hidden[-1], hidden[-2]])
    return hidden_cat @ params["fc_weight"].T + params["fc_bias"]


# ----------------------------------------------------------------------------- #
# Deterministic synthetic params in torch layout
# ----------------------------------------------------------------------------- #
def init_params(key, input_size, hidden_size, output_size):
    H, I, O = hidden_size, input_size, output_size
    ks = jax.random.split(key, 10)
    s = 1.0 / jnp.sqrt(jnp.float32(H))
    u = lambda kk, shape: jax.random.uniform(kk, shape, jnp.float32, -s, s)
    return {
        "weight_ih_l0": u(ks[0], (3 * H, I)),
        "weight_hh_l0": u(ks[1], (3 * H, H)),
        "bias_ih_l0": u(ks[2], (3 * H,)),
        "bias_hh_l0": u(ks[3], (3 * H,)),
        "weight_ih_l0_reverse": u(ks[4], (3 * H, I)),
        "weight_hh_l0_reverse": u(ks[5], (3 * H, H)),
        "bias_ih_l0_reverse": u(ks[6], (3 * H,)),
        "bias_hh_l0_reverse": u(ks[7], (3 * H,)),
        "fc_weight": u(ks[8], (O, 2 * H)),
        "fc_bias": u(ks[9], (O,)),
    }


if __name__ == "__main__":
    BATCH, SEQ, INPUT, HIDDEN, OUTPUT = 4, 8, 16, 32, 8

    key = jax.random.PRNGKey(0)
    k_x, k_p = jax.random.split(key)
    x = jax.random.normal(k_x, (BATCH, SEQ, INPUT), jnp.float32)
    params = init_params(k_p, INPUT, HIDDEN, OUTPUT)

    out = jax.jit(rnn_classifier_forward)(x, params)
    jax.block_until_ready(out)

    assert out.shape == (BATCH, OUTPUT), out.shape
    assert bool(jnp.all(jnp.isfinite(out)))
    # semantic self-check vs pure-JAX f32 reference (loose tol: bf16 matmul operands)
    ref = rnn_classifier_reference(x, params)
    assert bool(jnp.allclose(out, ref, atol=5e-2, rtol=5e-2)), \
        float(jnp.max(jnp.abs(out - ref)))
    print("KERNEL_OK")
</pallas_src>

<mosaic_0001>
module attributes {stable_mosaic.version = 11 : i64} {
  func.func @_bigru_classifier_kernel(%arg0: i32, %arg1: memref<8x8x16xbf16, #tpu.memory_space<vmem>>, %arg2: memref<16x384xbf16, #tpu.memory_space<vmem>>, %arg3: memref<1x384xf32, #tpu.memory_space<vmem>>, %arg4: memref<128x384xbf16, #tpu.memory_space<vmem>>, %arg5: memref<1x128xf32, #tpu.memory_space<vmem>>, %arg6: memref<128x128xbf16, #tpu.memory_space<vmem>>, %arg7: memref<1x128xf32, #tpu.memory_space<vmem>>, %arg8: memref<8x128xf32, #tpu.memory_space<vmem>>, %arg9: memref<64x384xf32, #tpu.memory_space<vmem>>) attributes {dimension_semantics = [#tpu.dimension_semantics<parallel>], iteration_bounds = array<i64: 1>, scalar_prefetch = 0 : i64, scratch_operands = 1 : i64, tpu.core_type = #tpu.core_type<tc>, window_params = [{transform_indices = @transform_0, window_bounds = array<i64: 8, 8, 16>}, {pipeline_mode = #tpu.pipeline_mode<synchronous>, transform_indices = @transform_1, window_bounds = array<i64: 16, 384>}, {pipeline_mode = #tpu.pipeline_mode<synchronous>, transform_indices = @transform_2, window_bounds = array<i64: 1, 384>}, {pipeline_mode = #tpu.pipeline_mode<synchronous>, transform_indices = @transform_3, window_bounds = array<i64: 128, 384>}, {pipeline_mode = #tpu.pipeline_mode<synchronous>, transform_indices = @transform_4, window_bounds = array<i64: 1, 128>}, {pipeline_mode = #tpu.pipeline_mode<synchronous>, transform_indices = @transform_5, window_bounds = array<i64: 128, 128>}, {pipeline_mode = #tpu.pipeline_mode<synchronous>, transform_indices = @transform_6, window_bounds = array<i64: 1, 128>}, {transform_indices = @transform_7, window_bounds = array<i64: 8, 128>}]} {
    %c0 = arith.constant 0 : index
    %c0_0 = arith.constant 0 : index
    %c0_1 = arith.constant 0 : index
    %0 = vector.load %arg1[%c0, %c0_0, %c0_1] : memref<8x8x16xbf16, #tpu.memory_space<vmem>>, vector<8x8x16xbf16>
    %1 = vector.shape_cast %0 : vector<8x8x16xbf16> to vector<64x16xbf16>
    %c0_2 = arith.constant 0 : index
    %c0_3 = arith.constant 0 : index
    %2 = vector.load %arg2[%c0_2, %c0_3] : memref<16x384xbf16, #tpu.memory_space<vmem>>, vector<16x384xbf16>
    %cst = arith.constant dense<0.000000e+00> : vector<64x384xf32>
    %3 = tpu.matmul %1, %2, %cst {dimension_numbers = #tpu.dot_dimension_numbers<[1], [0], [0], [1], [0, 0, 1, 1], [], []>} : vector<64x16xbf16>, vector<16x384xbf16>, vector<64x384xf32> -> vector<64x384xf32>
    %c0_4 = arith.constant 0 : index
    %c0_5 = arith.constant 0 : index
    %4 = vector.load %arg3[%c0_4, %c0_5] : memref<1x384xf32, #tpu.memory_space<vmem>>, vector<1x384xf32>
    %5 = vector.broadcast %4 : vector<1x384xf32> to vector<64x384xf32>
    %6 = arith.addf %3, %5 : vector<64x384xf32>
    %c0_6 = arith.constant 0 : index
    %c0_7 = arith.constant 0 : index
    %7 = vector.load %arg9[%c0_6, %c0_7] : memref<64x384xf32, #tpu.memory_space<vmem>>, vector<64x384xf32>
    tpu.vector_store %arg9[%c0_6, %c0_7], %6 {strides = array<i32>} : memref<64x384xf32, #tpu.memory_space<vmem>>, vector<64x384xf32>,
    %c0_8 = arith.constant 0 : index
    %c0_9 = arith.constant 0 : index
    %8 = vector.load %arg4[%c0_8, %c0_9] : memref<128x384xbf16, #tpu.memory_space<vmem>>, vector<128x384xbf16>
    %c0_10 = arith.constant 0 : index
    %c0_11 = arith.constant 0 : index
    %9 = vector.load %arg5[%c0_10, %c0_11] : memref<1x128xf32, #tpu.memory_space<vmem>>, vector<1x128xf32>
    %10 = vector.shape_cast %9 : vector<1x128xf32> to vector<1x128xf32>
    %11 = vector.broadcast %10 : vector<1x128xf32> to vector<8x128xf32>
    %12 = tpu.iota {dimensions = array<i32: 1>} : vector<8x384xi32>
    %c128_i32 = arith.constant 128 : i32
    %c0_i32 = arith.constant 0 : i32
    %13 = arith.cmpi eq, %c128_i32, %c0_i32 : i32
    %c1_i32 = arith.constant 1 : i32
    %14 = arith.select %13, %c1_i32, %c128_i32 : i32
    %15 = vector.broadcast %14 : i32 to vector<8x384xi32>
    %16 = arith.remsi %12, %15 : vector<8x384xi32>
    %c0_i32_12 = arith.constant 0 : i32
    %17 = vector.broadcast %c0_i32_12 : i32 to vector<8x384xi32>
    %18 = arith.cmpi ne, %16, %17 : vector<8x384xi32>
    %c0_i32_13 = arith.constant 0 : i32
    %19 = vector.broadcast %c0_i32_13 : i32 to vector<8x384xi32>
    %20 = arith.cmpi slt, %16, %19 : vector<8x384xi32>
    %c0_i32_14 = arith.constant 0 : i32
    %21 = arith.cmpi slt, %14, %c0_i32_14 : i32
    %22 = vector.broadcast %21 : i1 to vector<8x384xi1>
    %23 = vector.broadcast %22 : vector<8x384xi1> to vector<8x384xi1>
    %24 = arith.xori %20, %23 : vector<8x384xi1>
    %25 = arith.andi %24, %18 : vector<8x384xi1>
    %26 = vector.broadcast %14 : i32 to vector<8x384xi32>
    %27 = arith.addi %16, %26 : vector<8x384xi32>
    %28 = arith.select %25, %27, %16 : vector<8x384xi1>, vector<8x384xi32>
    %c32_i32 = arith.constant 32 : i32
    %29 = vector.broadcast %c32_i32 : i32 to vector<8x384xi32>
    %30 = arith.cmpi slt, %28, %29 : vector<8x384xi32>
    %cst_15 = arith.constant 0.000000e+00 : f32
    %31 = vector.broadcast %cst_15 : f32 to vector<8x128xf32>
    %c0_16 = arith.constant 0 : index
    %c0_17 = arith.constant 0 : index
    %32 = vector.load %arg9[%c0_16, %c0_17] : memref<64x384xf32, #tpu.memory_space<vmem>>, vector<8x384xf32>
    %c56 = arith.constant 56 : index
    %c0_18 = arith.constant 0 : index
    %33 = vector.load %arg9[%c56, %c0_18] : memref<64x384xf32, #tpu.memory_space<vmem>>, vector<8x384xf32>
    %34 = arith.select %30, %32, %33 : vector<8x384xi1>, vector<8x384xf32>
    %35 = arith.truncf %31 : vector<8x128xf32> to vector<8x128xbf16>
    %cst_19 = arith.constant dense<0.000000e+00> : vector<8x384xf32>
    %36 = tpu.matmul %35, %8, %cst_19 {dimension_numbers = #tpu.dot_dimension_numbers<[1], [0], [0], [1], [0, 0, 1, 1], [], []>} : vector<8x128xbf16>, vector<128x384xbf16>, vector<8x384xf32> -> vector<8x384xf32>
    %37 = vector.extract_strided_slice %34 {offsets = [0, 0], sizes = [8, 128], strides = [1, 1]} : vector<8x384xf32> to vector<8x128xf32>
    %38 = vector.extract_strided_slice %36 {offsets = [0, 0], sizes = [8, 128], strides = [1, 1]} : vector<8x384xf32> to vector<8x128xf32>
    %39 = arith.addf %37, %38 : vector<8x128xf32>
    %40 = arith.negf %39 : vector<8x128xf32>
    %41 = math.exp %40 : vector<8x128xf32>
    %cst_20 = arith.constant 1.000000e+00 : f32
    %42 = vector.broadcast %cst_20 : f32 to vector<8x128xf32>
    %43 = arith.addf %42, %41 : vector<8x128xf32>
    %44 = arith.divf %42, %43 : vector<8x128xf32>
    %45 = vector.extract_strided_slice %34 {offsets = [0, 128], sizes = [8, 128], strides = [1, 1]} : vector<8x384xf32> to vector<8x128xf32>
    %46 = vector.extract_strided_slice %36 {offsets = [0, 128], sizes = [8, 128], strides = [1, 1]} : vector<8x384xf32> to vector<8x128xf32>
    %47 = arith.addf %45, %46 : vector<8x128xf32>
    %48 = arith.negf %47 : vector<8x128xf32>
    %49 = math.exp %48 : vector<8x128xf32>
    %cst_21 = arith.constant 1.000000e+00 : f32
    %50 = vector.broadcast %cst_21 : f32 to vector<8x128xf32>
    %51 = arith.addf %50, %49 : vector<8x128xf32>
    %52 = arith.divf %50, %51 : vector<8x128xf32>
    %53 = vector.extract_strided_slice %34 {offsets = [0, 256], sizes = [8, 128], strides = [1, 1]} : vector<8x384xf32> to vector<8x128xf32>
    %54 = vector.extract_strided_slice %36 {offsets = [0, 256], sizes = [8, 128], strides = [1, 1]} : vector<8x384xf32> to vector<8x128xf32>
    %55 = arith.addf %54, %11 : vector<8x128xf32>
    %56 = arith.mulf %44, %55 : vector<8x128xf32>
    %57 = arith.addf %53, %56 : vector<8x128xf32>
    %58 = math.tanh %57 : vector<8x128xf32>
    %cst_22 = arith.constant 1.000000e+00 : f32
    %59 = vector.broadcast %cst_22 : f32 to vector<8x128xf32>
    %60 = arith.subf %59, %52 : vector<8x128xf32>
    %61 = arith.mulf %60, %58 : vector<8x128xf32>
    %62 = arith.mulf %52, %31 : vector<8x128xf32>
    %63 = arith.addf %61, %62 : vector<8x128xf32>
    %c8 = arith.constant 8 : index
    %c0_23 = arith.constant 0 : index
    %64 = vector.load %arg9[%c8, %c0_23] : memref<64x384xf32, #tpu.memory_space<vmem>>, vector<8x384xf32>
    %c48 = arith.constant 48 : index
    %c0_24 = arith.constant 0 : index
    %65 = vector.load %arg9[%c48, %c0_24] : memref<64x384xf32, #tpu.memory_space<vmem>>, vector<8x384xf32>
    %66 = arith.select %30, %64, %65 : vector<8x384xi1>, vector<8x384xf32>
    %67 = arith.truncf %63 : vector<8x128xf32> to vector<8x128xbf16>
    %cst_25 = arith.constant dense<0.000000e+00> : vector<8x384xf32>
    %68 = tpu.matmul %67, %8, %cst_25 {dimension_numbers = #tpu.dot_dimension_numbers<[1], [0], [0], [1], [0, 0, 1, 1], [], []>} : vector<8x128xbf16>, vector<128x384xbf16>, vector<8x384xf32> -> vector<8x384xf32>
    %69 = vector.extract_strided_slice %66 {offsets = [0, 0], sizes = [8, 128], strides = [1, 1]} : vector<8x384xf32> to vector<8x128xf32>
    %70 = vector.extract_strided_slice %68 {offsets = [0, 0], sizes = [8, 128], strides = [1, 1]} : vector<8x384xf32> to vector<8x128xf32>
    %71 = arith.addf %69, %70 : vector<8x128xf32>
    %72 = arith.negf %71 : vector<8x128xf32>
    %73 = math.exp %72 : vector<8x128xf32>
    %cst_26 = arith.constant 1.000000e+00 : f32
    %74 = vector.broadcast %cst_26 : f32 to vector<8x128xf32>
    %75 = arith.addf %74, %73 : vector<8x128xf32>
    %76 = arith.divf %74, %75 : vector<8x128xf32>
    %77 = vector.extract_strided_slice %66 {offsets = [0, 128], sizes = [8, 128], strides = [1, 1]} : vector<8x384xf32> to vector<8x128xf32>
    %78 = vector.extract_strided_slice %68 {offsets = [0, 128], sizes = [8, 128], strides = [1, 1]} : vector<8x384xf32> to vector<8x128xf32>
    %79 = arith.addf %77, %78 : vector<8x128xf32>
    %80 = arith.negf %79 : vector<8x128xf32>
    %81 = math.exp %80 : vector<8x128xf32>
    %cst_27 = arith.constant 1.000000e+00 : f32
    %82 = vector.broadcast %cst_27 : f32 to vector<8x128xf32>
    %83 = arith.addf %82, %81 : vector<8x128xf32>
    %84 = arith.divf %82, %83 : vector<8x128xf32>
    %85 = vector.extract_strided_slice %66 {offsets = [0, 256], sizes = [8, 128], strides = [1, 1]} : vector<8x384xf32> to vector<8x128xf32>
    %86 = vector.extract_strided_slice %68 {offsets = [0, 256], sizes = [8, 128], strides = [1, 1]} : vector<8x384xf32> to vector<8x128xf32>
    %87 = arith.addf %86, %11 : vector<8x128xf32>
    %88 = arith.mulf %76, %87 : vector<8x128xf32>
    %89 = arith.addf %85, %88 : vector<8x128xf32>
    %90 = math.tanh %89 : vector<8x128xf32>
    %cst_28 = arith.constant 1.000000e+00 : f32
    %91 = vector.broadcast %cst_28 : f32 to vector<8x128xf32>
    %92 = arith.subf %91, %84 : vector<8x128xf32>
    %93 = arith.mulf %92, %90 : vector<8x128xf32>
    %94 = arith.mulf %84, %63 : vector<8x128xf32>
    %95 = arith.addf %93, %94 : vector<8x128xf32>
    %c16 = arith.constant 16 : index
    %c0_29 = arith.constant 0 : index
    %96 = vector.load %arg9[%c16, %c0_29] : memref<64x384xf32, #tpu.memory_space<vmem>>, vector<8x384xf32>
    %c40 = arith.constant 40 : index
    %c0_30 = arith.constant 0 : index
    %97 = vector.load %arg9[%c40, %c0_30] : memref<64x384xf32, #tpu.memory_space<vmem>>, vector<8x384xf32>
    %98 = arith.select %30, %96, %97 : vector<8x384xi1>, vector<8x384xf32>
    %99 = arith.truncf %95 : vector<8x128xf32> to vector<8x128xbf16>
    %cst_31 = arith.constant dense<0.000000e+00> : vector<8x384xf32>
    %100 = tpu.matmul %99, %8, %cst_31 {dimension_numbers = #tpu.dot_dimension_numbers<[1], [0], [0], [1], [0, 0, 1, 1], [], []>} : vector<8x128xbf16>, vector<128x384xbf16>, vector<8x384xf32> -> vector<8x384xf32>
    %101 = vector.extract_strided_slice %98 {offsets = [0, 0], sizes = [8, 128], strides = [1, 1]} : vector<8x384xf32> to vector<8x128xf32>
    %102 = vector.extract_strided_slice %100 {offsets = [0, 0], sizes = [8, 128], strides = [1, 1]} : vector<8x384xf32> to vector<8x128xf32>
    %103 = arith.addf %101, %102 : vector<8x128xf32>
    %104 = arith.negf %103 : vector<8x128xf32>
    %105 = math.exp %104 : vector<8x128xf32>
    %cst_32 = arith.constant 1.000000e+00 : f32
    %106 = vector.broadcast %cst_32 : f32 to vector<8x128xf32>
    %107 = arith.addf %106, %105 : vector<8x128xf32>
    %108 = arith.divf %106, %107 : vector<8x128xf32>
    %109 = vector.extract_strided_slice %98 {offsets = [0, 128], sizes = [8, 128], strides = [1, 1]} : vector<8x384xf32> to vector<8x128xf32>
    %110 = vector.extract_strided_slice %100 {offsets = [0, 128], sizes = [8, 128], strides = [1, 1]} : vector<8x384xf32> to vector<8x128xf32>
    %111 = arith.addf %109, %110 : vector<8x128xf32>
    %112 = arith.negf %111 : vector<8x128xf32>
    %113 = math.exp %112 : vector<8x128xf32>
    %cst_33 = arith.constant 1.000000e+00 : f32
    %114 = vector.broadcast %cst_33 : f32 to vector<8x128xf32>
    %115 = arith.addf %114, %113 : vector<8x128xf32>
    %116 = arith.divf %114, %115 : vector<8x128xf32>
    %117 = vector.extract_strided_slice %98 {offsets = [0, 256], sizes = [8, 128], strides = [1, 1]} : vector<8x384xf32> to vector<8x128xf32>
    %118 = vector.extract_strided_slice %100 {offsets = [0, 256], sizes = [8, 128], strides = [1, 1]} : vector<8x384xf32> to vector<8x128xf32>
    %119 = arith.addf %118, %11 : vector<8x128xf32>
    %120 = arith.mulf %108, %119 : vector<8x128xf32>
    %121 = arith.addf %117, %120 : vector<8x128xf32>
    %122 = math.tanh %121 : vector<8x128xf32>
    %cst_34 = arith.constant 1.000000e+00 : f32
    %123 = vector.broadcast %cst_34 : f32 to vector<8x128xf32>
    %124 = arith.subf %123, %116 : vector<8x128xf32>
    %125 = arith.mulf %124, %122 : vector<8x128xf32>
    %126 = arith.mulf %116, %95 : vector<8x128xf32>
    %127 = arith.addf %125, %126 : vector<8x128xf32>
    %c24 = arith.constant 24 : index
    %c0_35 = arith.constant 0 : index
    %128 = vector.load %arg9[%c24, %c0_35] : memref<64x384xf32, #tpu.memory_space<vmem>>, vector<8x384xf32>
    %c32 = arith.constant 32 : index
    %c0_36 = arith.constant 0 : index
    %129 = vector.load %arg9[%c32, %c0_36] : memref<64x384xf32, #tpu.memory_space<vmem>>, vector<8x384xf32>
    %130 = arith.select %30, %128, %129 : vector<8x384xi1>, vector<8x384xf32>
    %131 = arith.truncf %127 : vector<8x128xf32> to vector<8x128xbf16>
    %cst_37 = arith.constant dense<0.000000e+00> : vector<8x384xf32>
    %132 = tpu.matmul %131, %8, %cst_37 {dimension_numbers = #tpu.dot_dimension_numbers<[1], [0], [0], [1], [0, 0, 1, 1], [], []>} : vector<8x128xbf16>, vector<128x384xbf16>, vector<8x384xf32> -> vector<8x384xf32>
    %133 = vector.extract_strided_slice %130 {offsets = [0, 0], sizes = [8, 128], strides = [1, 1]} : vector<8x384xf32> to vector<8x128xf32>
    %134 = vector.extract_strided_slice %132 {offsets = [0, 0], sizes = [8, 128], strides = [1, 1]} : vector<8x384xf32> to vector<8x128xf32>
    %135 = arith.addf %133, %134 : vector<8x128xf32>
    %136 = arith.negf %135 : vector<8x128xf32>
    %137 = math.exp %136 : vector<8x128xf32>
    %cst_38 = arith.constant 1.000000e+00 : f32
    %138 = vector.broadcast %cst_38 : f32 to vector<8x128xf32>
    %139 = arith.addf %138, %137 : vector<8x128xf32>
    %140 = arith.divf %138, %139 : vector<8x128xf32>
    %141 = vector.extract_strided_slice %130 {offsets = [0, 128], sizes = [8, 128], strides = [1, 1]} : vector<8x384xf32> to vector<8x128xf32>
    %142 = vector.extract_strided_slice %132 {offsets = [0, 128], sizes = [8, 128], strides = [1, 1]} : vector<8x384xf32> to vector<8x128xf32>
    %143 = arith.addf %141, %142 : vector<8x128xf32>
    %144 = arith.negf %143 : vector<8x128xf32>
    %145 = math.exp %144 : vector<8x128xf32>
    %cst_39 = arith.constant 1.000000e+00 : f32
    %146 = vector.broadcast %cst_39 : f32 to vector<8x128xf32>
    %147 = arith.addf %146, %145 : vector<8x128xf32>
    %148 = arith.divf %146, %147 : vector<8x128xf32>
    %149 = vector.extract_strided_slice %130 {offsets = [0, 256], sizes = [8, 128], strides = [1, 1]} : vector<8x384xf32> to vector<8x128xf32>
    %150 = vector.extract_strided_slice %132 {offsets = [0, 256], sizes = [8, 128], strides = [1, 1]} : vector<8x384xf32> to vector<8x128xf32>
    %151 = arith.addf %150, %11 : vector<8x128xf32>
    %152 = arith.mulf %140, %151 : vector<8x128xf32>
    %153 = arith.addf %149, %152 : vector<8x128xf32>
    %154 = math.tanh %153 : vector<8x128xf32>
    %cst_40 = arith.constant 1.000000e+00 : f32
    %155 = vector.broadcast %cst_40 : f32 to vector<8x128xf32>
    %156 = arith.subf %155, %148 : vector<8x128xf32>
    %157 = arith.mulf %156, %154 : vector<8x128xf32>
    %158 = arith.mulf %148, %127 : vector<8x128xf32>
    %159 = arith.addf %157, %158 : vector<8x128xf32>
    %c32_41 = arith.constant 32 : index
    %c0_42 = arith.constant 0 : index
    %160 = vector.load %arg9[%c32_41, %c0_42] : memref<64x384xf32, #tpu.memory_space<vmem>>, vector<8x384xf32>
    %c24_43 = arith.constant 24 : index
    %c0_44 = arith.constant 0 : index
    %161 = vector.load %arg9[%c24_43, %c0_44] : memref<64x384xf32, #tpu.memory_space<vmem>>, vector<8x384xf32>
    %162 = arith.select %30, %160, %161 : vector<8x384xi1>, vector<8x384xf32>
    %163 = arith.truncf %159 : vector<8x128xf32> to vector<8x128xbf16>
    %cst_45 = arith.constant dense<0.000000e+00> : vector<8x384xf32>
    %164 = tpu.matmul %163, %8, %cst_45 {dimension_numbers = #tpu.dot_dimension_numbers<[1], [0], [0], [1], [0, 0, 1, 1], [], []>} : vector<8x128xbf16>, vector<128x384xbf16>, vector<8x384xf32> -> vector<8x384xf32>
    %165 = vector.extract_strided_slice %162 {offsets = [0, 0], sizes = [8, 128], strides = [1, 1]} : vector<8x384xf32> to vector<8x128xf32>
    %166 = vector.extract_strided_slice %164 {offsets = [0, 0], sizes = [8, 128], strides = [1, 1]} : vector<8x384xf32> to vector<8x128xf32>
    %167 = arith.addf %165, %166 : vector<8x128xf32>
    %168 = arith.negf %167 : vector<8x128xf32>
    %169 = math.exp %168 : vector<8x128xf32>
    %cst_46 = arith.constant 1.000000e+00 : f32
    %170 = vector.broadcast %cst_46 : f32 to vector<8x128xf32>
    %171 = arith.addf %170, %169 : vector<8x128xf32>
    %172 = arith.divf %170, %171 : vector<8x128xf32>
    %173 = vector.extract_strided_slice %162 {offsets = [0, 128], sizes = [8, 128], strides = [1, 1]} : vector<8x384xf32> to vector<8x128xf32>
    %174 = vector.extract_strided_slice %164 {offsets = [0, 128], sizes = [8, 128], strides = [1, 1]} : vector<8x384xf32> to vector<8x128xf32>
    %175 = arith.addf %173, %174 : vector<8x128xf32>
    %176 = arith.negf %175 : vector<8x128xf32>
    %177 = math.exp %176 : vector<8x128xf32>
    %cst_47 = arith.constant 1.000000e+00 : f32
    %178 = vector.broadcast %cst_47 : f32 to vector<8x128xf32>
    %179 = arith.addf %178, %177 : vector<8x128xf32>
    %180 = arith.divf %178, %179 : vector<8x128xf32>
    %181 = vector.extract_strided_slice %162 {offsets = [0, 256], sizes = [8, 128], strides = [1, 1]} : vector<8x384xf32> to vector<8x128xf32>
    %182 = vector.extract_strided_slice %164 {offsets = [0, 256], sizes = [8, 128], strides = [1, 1]} : vector<8x384xf32> to vector<8x128xf32>
    %183 = arith.addf %182, %11 : vector<8x128xf32>
    %184 = arith.mulf %172, %183 : vector<8x128xf32>
    %185 = arith.addf %181, %184 : vector<8x128xf32>
    %186 = math.tanh %185 : vector<8x128xf32>
    %cst_48 = arith.constant 1.000000e+00 : f32
    %187 = vector.broadcast %cst_48 : f32 to vector<8x128xf32>
    %188 = arith.subf %187, %180 : vector<8x128xf32>
    %189 = arith.mulf %188, %186 : vector<8x128xf32>
    %190 = arith.mulf %180, %159 : vector<8x128xf32>
    %191 = arith.addf %189, %190 : vector<8x128xf32>
    %c40_49 = arith.constant 40 : index
    %c0_50 = arith.constant 0 : index
    %192 = vector.load %arg9[%c40_49, %c0_50] : memref<64x384xf32, #tpu.memory_space<vmem>>, vector<8x384xf32>
    %c16_51 = arith.constant 16 : index
    %c0_52 = arith.constant 0 : index
    %193 = vector.load %arg9[%c16_51, %c0_52] : memref<64x384xf32, #tpu.memory_space<vmem>>, vector<8x384xf32>
    %194 = arith.select %30, %192, %193 : vector<8x384xi1>, vector<8x384xf32>
    %195 = arith.truncf %191 : vector<8x128xf32> to vector<8x128xbf16>
    %cst_53 = arith.constant dense<0.000000e+00> : vector<8x384xf32>
    %196 = tpu.matmul %195, %8, %cst_53 {dimension_numbers = #tpu.dot_dimension_numbers<[1], [0], [0], [1], [0, 0, 1, 1], [], []>} : vector<8x128xbf16>, vector<128x384xbf16>, vector<8x384xf32> -> vector<8x384xf32>
    %197 = vector.extract_strided_slice %194 {offsets = [0, 0], sizes = [8, 128], strides = [1, 1]} : vector<8x384xf32> to vector<8x128xf32>
    %198 = vector.extract_strided_slice %196 {offsets = [0, 0], sizes = [8, 128], strides = [1, 1]} : vector<8x384xf32> to vector<8x128xf32>
    %199 = arith.addf %197, %198 : vector<8x128xf32>
    %200 = arith.negf %199 : vector<8x128xf32>
    %201 = math.exp %200 : vector<8x128xf32>
    %cst_54 = arith.constant 1.000000e+00 : f32
    %202 = vector.broadcast %cst_54 : f32 to vector<8x128xf32>
    %203 = arith.addf %202, %201 : vector<8x128xf32>
    %204 = arith.divf %202, %203 : vector<8x128xf32>
    %205 = vector.extract_strided_slice %194 {offsets = [0, 128], sizes = [8, 128], strides = [1, 1]} : vector<8x384xf32> to vector<8x128xf32>
    %206 = vector.extract_strided_slice %196 {offsets = [0, 128], sizes = [8, 128], strides = [1, 1]} : vector<8x384xf32> to vector<8x128xf32>
    %207 = arith.addf %205, %206 : vector<8x128xf32>
    %208 = arith.negf %207 : vector<8x128xf32>
    %209 = math.exp %208 : vector<8x128xf32>
    %cst_55 = arith.constant 1.000000e+00 : f32
    %210 = vector.broadcast %cst_55 : f32 to vector<8x128xf32>
    %211 = arith.addf %210, %209 : vector<8x128xf32>
    %212 = arith.divf %210, %211 : vector<8x128xf32>
    %213 = vector.extract_strided_slice %194 {offsets = [0, 256], sizes = [8, 128], strides = [1, 1]} : vector<8x384xf32> to vector<8x128xf32>
    %214 = vector.extract_strided_slice %196 {offsets = [0, 256], sizes = [8, 128], strides = [1, 1]} : vector<8x384xf32> to vector<8x128xf32>
    %215 = arith.addf %214, %11 : vector<8x128xf32>
    %216 = arith.mulf %204, %215 : vector<8x128xf32>
    %217 = arith.addf %213, %216 : vector<8x128xf32>
    %218 = math.tanh %217 : vector<8x128xf32>
    %cst_56 = arith.constant 1.000000e+00 : f32
    %219 = vector.broadcast %cst_56 : f32 to vector<8x128xf32>
    %220 = arith.subf %219, %212 : vector<8x128xf32>
    %221 = arith.mulf %220, %218 : vector<8x128xf32>
    %222 = arith.mulf %212, %191 : vector<8x128xf32>
    %223 = arith.addf %221, %222 : vector<8x128xf32>
    %c48_57 = arith.constant 48 : index
    %c0_58 = arith.constant 0 : index
    %224 = vector.load %arg9[%c48_57, %c0_58] : memref<64x384xf32, #tpu.memory_space<vmem>>, vector<8x384xf32>
    %c8_59 = arith.constant 8 : index
    %c0_60 = arith.constant 0 : index
    %225 = vector.load %arg9[%c8_59, %c0_60] : memref<64x384xf32, #tpu.memory_space<vmem>>, vector<8x384xf32>
    %226 = arith.select %30, %224, %225 : vector<8x384xi1>, vector<8x384xf32>
    %227 = arith.truncf %223 : vector<8x128xf32> to vector<8x128xbf16>
    %cst_61 = arith.constant dense<0.000000e+00> : vector<8x384xf32>
    %228 = tpu.matmul %227, %8, %cst_61 {dimension_numbers = #tpu.dot_dimension_numbers<[1], [0], [0], [1], [0, 0, 1, 1], [], []>} : vector<8x128xbf16>, vector<128x384xbf16>, vector<8x384xf32> -> vector<8x384xf32>
    %229 = vector.extract_strided_slice %226 {offsets = [0, 0], sizes = [8, 128], strides = [1, 1]} : vector<8x384xf32> to vector<8x128xf32>
    %230 = vector.extract_strided_slice %228 {offsets = [0, 0], sizes = [8, 128], strides = [1, 1]} : vector<8x384xf32> to vector<8x128xf32>
    %231 = arith.addf %229, %230 : vector<8x128xf32>
    %232 = arith.negf %231 : vector<8x128xf32>
    %233 = math.exp %232 : vector<8x128xf32>
    %cst_62 = arith.constant 1.000000e+00 : f32
    %234 = vector.broadcast %cst_62 : f32 to vector<8x128xf32>
    %235 = arith.addf %234, %233 : vector<8x128xf32>
    %236 = arith.divf %234, %235 : vector<8x128xf32>
    %237 = vector.extract_strided_slice %226 {offsets = [0, 128], sizes = [8, 128], strides = [1, 1]} : vector<8x384xf32> to vector<8x128xf32>
    %238 = vector.extract_strided_slice %228 {offsets = [0, 128], sizes = [8, 128], strides = [1, 1]} : vector<8x384xf32> to vector<8x128xf32>
    %239 = arith.addf %237, %238 : vector<8x128xf32>
    %240 = arith.negf %239 : vector<8x128xf32>
    %241 = math.exp %240 : vector<8x128xf32>
    %cst_63 = arith.constant 1.000000e+00 : f32
    %242 = vector.broadcast %cst_63 : f32 to vector<8x128xf32>
    %243 = arith.addf %242, %241 : vector<8x128xf32>
    %244 = arith.divf %242, %243 : vector<8x128xf32>
    %245 = vector.extract_strided_slice %226 {offsets = [0, 256], sizes = [8, 128], strides = [1, 1]} : vector<8x384xf32> to vector<8x128xf32>
    %246 = vector.extract_strided_slice %228 {offsets = [0, 256], sizes = [8, 128], strides = [1, 1]} : vector<8x384xf32> to vector<8x128xf32>
    %247 = arith.addf %246, %11 : vector<8x128xf32>
    %248 = arith.mulf %236, %247 : vector<8x128xf32>
    %249 = arith.addf %245, %248 : vector<8x128xf32>
    %250 = math.tanh %249 : vector<8x128xf32>
    %cst_64 = arith.constant 1.000000e+00 : f32
    %251 = vector.broadcast %cst_64 : f32 to vector<8x128xf32>
    %252 = arith.subf %251, %244 : vector<8x128xf32>
    %253 = arith.mulf %252, %250 : vector<8x128xf32>
    %254 = arith.mulf %244, %223 : vector<8x128xf32>
    %255 = arith.addf %253, %254 : vector<8x128xf32>
    %c56_65 = arith.constant 56 : index
    %c0_66 = arith.constant 0 : index
    %256 = vector.load %arg9[%c56_65, %c0_66] : memref<64x384xf32, #tpu.memory_space<vmem>>, vector<8x384xf32>
    %c0_67 = arith.constant 0 : index
    %c0_68 = arith.constant 0 : index
    %257 = vector.load %arg9[%c0_67, %c0_68] : memref<64x384xf32, #tpu.memory_space<vmem>>, vector<8x384xf32>
    %258 = arith.select %30, %256, %257 : vector<8x384xi1>, vector<8x384xf32>
    %259 = arith.truncf %255 : vector<8x128xf32> to vector<8x128xbf16>
    %cst_69 = arith.constant dense<0.000000e+00> : vector<8x384xf32>
    %260 = tpu.matmul %259, %8, %cst_69 {dimension_numbers = #tpu.dot_dimension_numbers<[1], [0], [0], [1], [0, 0, 1, 1], [], []>} : vector<8x128xbf16>, vector<128x384xbf16>, vector<8x384xf32> -> vector<8x384xf32>
    %261 = vector.extract_strided_slice %258 {offsets = [0, 0], sizes = [8, 128], strides = [1, 1]} : vector<8x384xf32> to vector<8x128xf32>
    %262 = vector.extract_strided_slice %260 {offsets = [0, 0], sizes = [8, 128], strides = [1, 1]} : vector<8x384xf32> to vector<8x128xf32>
    %263 = arith.addf %261, %262 : vector<8x128xf32>
    %264 = arith.negf %263 : vector<8x128xf32>
    %265 = math.exp %264 : vector<8x128xf32>
    %cst_70 = arith.constant 1.000000e+00 : f32
    %266 = vector.broadcast %cst_70 : f32 to vector<8x128xf32>
    %267 = arith.addf %266, %265 : vector<8x128xf32>
    %268 = arith.divf %266, %267 : vector<8x128xf32>
    %269 = vector.extract_strided_slice %258 {offsets = [0, 128], sizes = [8, 128], strides = [1, 1]} : vector<8x384xf32> to vector<8x128xf32>
    %270 = vector.extract_strided_slice %260 {offsets = [0, 128], sizes = [8, 128], strides = [1, 1]} : vector<8x384xf32> to vector<8x128xf32>
    %271 = arith.addf %269, %270 : vector<8x128xf32>
    %272 = arith.negf %271 : vector<8x128xf32>
    %273 = math.exp %272 : vector<8x128xf32>
    %cst_71 = arith.constant 1.000000e+00 : f32
    %274 = vector.broadcast %cst_71 : f32 to vector<8x128xf32>
    %275 = arith.addf %274, %273 : vector<8x128xf32>
    %276 = arith.divf %274, %275 : vector<8x128xf32>
    %277 = vector.extract_strided_slice %258 {offsets = [0, 256], sizes = [8, 128], strides = [1, 1]} : vector<8x384xf32> to vector<8x128xf32>
    %278 = vector.extract_strided_slice %260 {offsets = [0, 256], sizes = [8, 128], strides = [1, 1]} : vector<8x384xf32> to vector<8x128xf32>
    %279 = arith.addf %278, %11 : vector<8x128xf32>
    %280 = arith.mulf %268, %279 : vector<8x128xf32>
    %281 = arith.addf %277, %280 : vector<8x128xf32>
    %282 = math.tanh %281 : vector<8x128xf32>
    %cst_72 = arith.constant 1.000000e+00 : f32
    %283 = vector.broadcast %cst_72 : f32 to vector<8x128xf32>
    %284 = arith.subf %283, %276 : vector<8x128xf32>
    %285 = arith.mulf %284, %282 : vector<8x128xf32>
    %286 = arith.mulf %276, %255 : vector<8x128xf32>
    %287 = arith.addf %285, %286 : vector<8x128xf32>
    %288 = arith.truncf %287 : vector<8x128xf32> to vector<8x128xbf16>
    %c0_73 = arith.constant 0 : index
    %c0_74 = arith.constant 0 : index
    %289 = vector.load %arg6[%c0_73, %c0_74] : memref<128x128xbf16, #tpu.memory_space<vmem>>, vector<128x128xbf16>
    %cst_75 = arith.constant dense<0.000000e+00> : vector<8x128xf32>
    %290 = tpu.matmul %288, %289, %cst_75 {dimension_numbers = #tpu.dot_dimension_numbers<[1], [0], [0], [1], [0, 0, 1, 1], [], []>} : vector<8x128xbf16>, vector<128x128xbf16>, vector<8x128xf32> -> vector<8x128xf32>
    %c0_76 = arith.constant 0 : index
    %c0_77 = arith.constant 0 : index
    %291 = vector.load %arg7[%c0_76, %c0_77] : memref<1x128xf32, #tpu.memory_space<vmem>>, vector<1x128xf32>
    %292 = vector.broadcast %291 : vector<1x128xf32> to vector<8x128xf32>
    %293 = arith.addf %290, %292 : vector<8x128xf32>
    %c0_78 = arith.constant 0 : index
    %c0_79 = arith.constant 0 : index
    %294 = vector.load %arg8[%c0_78, %c0_79] : memref<8x128xf32, #tpu.memory_space<vmem>>, vector<8x128xf32>
    tpu.vector_store %arg8[%c0_78, %c0_79], %293 {strides = array<i32>} : memref<8x128xf32, #tpu.memory_space<vmem>>, vector<8x128xf32>,
    return
  }
  func.func @transform_0(%arg0: i32) -> (i32, i32, i32) {
    %c0_i32 = arith.constant 0 : i32
    %c0_i32_0 = arith.constant 0 : i32
    %c0_i32_1 = arith.constant 0 : i32
    return %c0_i32, %arg0, %c0_i32_0 : i32, i32, i32
  }
  func.func @transform_1(%arg0: i32) -> (i32, i32) {
    %c0_i32 = arith.constant 0 : i32
    %c0_i32_0 = arith.constant 0 : i32
    %c0_i32_1 = arith.constant 0 : i32
    return %c0_i32, %c0_i32_0 : i32, i32
  }
  func.func @transform_2(%arg0: i32) -> (i32, i32) {
    %c0_i32 = arith.constant 0 : i32
    %c0_i32_0 = arith.constant 0 : i32
    %c0_i32_1 = arith.constant 0 : i32
    return %c0_i32, %c0_i32_0 : i32, i32
  }
  func.func @transform_3(%arg0: i32) -> (i32, i32) {
    %c0_i32 = arith.constant 0 : i32
    %c0_i32_0 = arith.constant 0 : i32
    %c0_i32_1 = arith.constant 0 : i32
    return %c0_i32, %c0_i32_0 : i32, i32
  }
  func.func @transform_4(%arg0: i32) -> (i32, i32) {
    %c0_i32 = arith.constant 0 : i32
    %c0_i32_0 = arith.constant 0 : i32
    %c0_i32_1 = arith.constant 0 : i32
    return %c0_i32, %c0_i32_0 : i32, i32
  }
  func.func @transform_5(%arg0: i32) -> (i32, i32) {
    %c0_i32 = arith.constant 0 : i32
    %c0_i32_0 = arith.constant 0 : i32
    %c0_i32_1 = arith.constant 0 : i32
    return %c0_i32, %c0_i32_0 : i32, i32
  }
  func.func @transform_6(%arg0: i32) -> (i32, i32) {
    %c0_i32 = arith.constant 0 : i32
    %c0_i32_0 = arith.constant 0 : i32
    %c0_i32_1 = arith.constant 0 : i32
    return %c0_i32, %c0_i32_0 : i32, i32
  }
  func.func @transform_7(%arg0: i32) -> (i32, i32) {
    %c0_i32 = arith.constant 0 : i32
    %c0_i32_0 = arith.constant 0 : i32
    return %arg0, %c0_i32 : i32, i32
  }
}

</mosaic_0001>

<llo_original>
// kernel: rnn_classifier_forward.1
$region0: #{rnn_classifier_forward.1}
  #allocation0 [shape = 'u32[]', space=smem, size = 0x4, offset = 0x4, fixed_abs, tag = 'smem constant byte address 0x4 - core index']
  #allocation1 [shape = 'u32[72,128]{1,0:T(1,128)}', space=vmem, size = 0x9000, scoped, tag = 'internal scratch']
  #allocation2 [shape = 'f32[64,384]{1,0:T(8,128)}', space=vmem, size = 0x18000, scoped, tag = 'scratch operand']
  %s0 = inlined_call_operand.vmem [shape: bf16[8,8,16], index: 0, kind: input, shape index: {}]
  %s1 = inlined_call_operand.vmem [shape: bf16[16,384], index: 1, kind: input, shape index: {}]
  %s2 = inlined_call_operand.vmem [shape: f32[1,384], index: 2, kind: input, shape index: {}]
  %s3 = inlined_call_operand.vmem [shape: bf16[128,384], index: 3, kind: input, shape index: {}]
  %s4 = inlined_call_operand.vmem [shape: f32[1,128], index: 4, kind: input, shape index: {}]
  %s5 = inlined_call_operand.vmem [shape: bf16[128,128], index: 5, kind: input, shape index: {}]
  %s6 = inlined_call_operand.vmem [shape: f32[1,128], index: 6, kind: input, shape index: {}]
  %s7 = inlined_call_operand.vmem [shape: f32[8,128], index: 7, kind: output, shape index: {}]
  %s8 = sld [smem:[#allocation0]]
  $region38: #{rnn_classifier_forward.1} parent=0
    _
  %s10 = ssub.s32 1, %s8
  %s11 = scalar_select 0, %s10, %s8
  // Predicated region
  $region2: #{rnn_classifier_forward.1} parent=0 // pred_check
    _
  $region3: #{rnn_classifier_forward.1} parent=0 // pred_check_branch
    %13 = sbr.rel (0) target = $region5
  $region4: #{rnn_classifier_forward.1} parent=0 // pred_region
    _
  $region5: #{rnn_classifier_forward.1} parent=0 // pred_fallthru
    _
  // Predicated region
  $region6: #{rnn_classifier_forward.1} parent=0 // pred_check
    _
  $region7: #{rnn_classifier_forward.1} parent=0 // pred_check_branch
    %15 = sbr.rel (0) target = $region9
  $region8: #{rnn_classifier_forward.1} parent=0 // pred_region
    _
  $region9: #{rnn_classifier_forward.1} parent=0 // pred_fallthru
    _
  // Predicated region
  $region10: #{rnn_classifier_forward.1} parent=0 // pred_check
    _
  $region11: #{rnn_classifier_forward.1} parent=0 // pred_check_branch
    %17 = sbr.rel (0) target = $region13
  $region12: #{rnn_classifier_forward.1} parent=0 // pred_region
    _
  $region13: #{rnn_classifier_forward.1} parent=0 // pred_fallthru
    _
  // Predicated region
  $region14: #{rnn_classifier_forward.1} parent=0 // pred_check
    _
  $region15: #{rnn_classifier_forward.1} parent=0 // pred_check_branch
    %19 = sbr.rel (0) target = $region17
  $region16: #{rnn_classifier_forward.1} parent=0 // pred_region
    _
  $region17: #{rnn_classifier_forward.1} parent=0 // pred_fallthru
    _
  // Predicated region
  $region18: #{rnn_classifier_forward.1} parent=0 // pred_check
    _
  $region19: #{rnn_classifier_forward.1} parent=0 // pred_check_branch
    %21 = sbr.rel (0) target = $region21
  $region20: #{rnn_classifier_forward.1} parent=0 // pred_region
    _
  $region21: #{rnn_classifier_forward.1} parent=0 // pred_fallthru
    _
  // Predicated region
  $region22: #{rnn_classifier_forward.1} parent=0 // pred_check
    _
  $region23: #{rnn_classifier_forward.1} parent=0 // pred_check_branch
    %23 = sbr.rel (0) target = $region25
  $region24: #{rnn_classifier_forward.1} parent=0 // pred_region
    _
  $region25: #{rnn_classifier_forward.1} parent=0 // pred_fallthru
    _
  // Predicated region
  $region26: #{rnn_classifier_forward.1} parent=0 // pred_check
    _
  $region27: #{rnn_classifier_forward.1} parent=0 // pred_check_branch
    %25 = sbr.rel (0) target = $region29
  $region28: #{rnn_classifier_forward.1} parent=0 // pred_region
    _
  $region29: #{rnn_classifier_forward.1} parent=0 // pred_fallthru
    _
  %v27 = vld [vmem:[%s0] sm:$0xf]
  %v28 = vld [vmem:[%s0 + $0x4] sm:$0xf]
  %v29 = vld [vmem:[%s0 + $0x8] sm:$0xf]
  %v30 = vld [vmem:[%s0 + $0xc] sm:$0xf]
  %v31 = vld [vmem:[%s0 + $0x10] sm:$0xf]
  %v32 = vld [vmem:[%s0 + $0x14] sm:$0xf]
  %v33 = vld [vmem:[%s0 + $0x18] sm:$0xf]
  %v34 = vld [vmem:[%s0 + $0x1c] sm:$0xf]
  %v35 = vld [vmem:[%s1] sm:$0xff]
  %v36 = vld [vmem:[%s1 + $0x8] sm:$0xf]
  %v37 = vld [vmem:[%s1 + $0xc] sm:$0xff]
  %v38 = vld [vmem:[%s1 + $0x14] sm:$0xf]
  %v39 = vld [vmem:[%s2] sm:$0x7]
  %v41 = vperm.slane %v39, 0
  %v42 = vperm.slane %v39, 1
  %v43 = vperm.slane %v39, 2
  %v55 = vunpack.c.l.b16 %v27
  %v56 = vunpack.c.l.b16 %v28
  %v57 = vunpack.c.l.b16 %v29
  %v58 = vunpack.c.l.b16 %v30
  %v59 = vunpack.c.l.b16 %v31
  %v60 = vunpack.c.l.b16 %v32
  %v61 = vunpack.c.l.b16 %v33
  %v62 = vunpack.c.l.b16 %v34
  %v63 = vpack.c.b16 %v56, %v55
  %v64 = vpack.c.b16 %v58, %v57
  %v65 = vpack.c.b16 %v60, %v59
  %v66 = vpack.c.b16 %v62, %v61
  %v71 = vunpack.c.l.b16 %v35
  %v72 = vunpack.c.h.b16 %v35
  %v73 = vunpack.c.l.b16 %v36
  %v74 = vunpack.c.l.b16 %v37
  %v75 = vunpack.c.h.b16 %v37
  %v76 = vunpack.c.l.b16 %v38
  %v77 = vpack.c.b16 %v74, %v71
  %v78 = vpack.c.b16 %v75, %v72
  %v79 = vpack.c.b16 %v76, %v73
  %vm83 = vcmask 130048
  %v85 = vsel %vm83, %v63, 0
  %v88 = vsel %vm83, %v64, 0
  %v91 = vsel %vm83, %v65, 0
  %v94 = vsel %vm83, %v66, 0
  %96 = vmatpush.bf16.msra.mxu0 0
  %97 = vmatpush.bf16.msra.mxu0 0
  %98 = vmatpush.bf16.msra.mxu0 0
  %99 = vmatpush.bf16.msra.mxu0 0
  %100 = vmatpush.bf16.msra.mxu0 0
  %101 = vmatpush.bf16.msra.mxu0 0
  %102 = vmatpush.bf16.msra.mxu0 0
  %103 = vmatpush.bf16.msra.mxu0 %v77
  %104 = vmatmul.bf16.gmra.mxu0 %v85
  %v105 = vpop.f32.mrf.mxu0
  %v106 = vadd.f32 %v41, %v105
  %v107 = vpop.f32.mrf.mxu0
  %v108 = vadd.f32 %v41, %v107
  %109 = vmatmul.bf16.gmra.mxu0 %v88
  %v110 = vpop.f32.mrf.mxu0
  %v111 = vadd.f32 %v41, %v110
  %v112 = vpop.f32.mrf.mxu0
  %v113 = vadd.f32 %v41, %v112
  %114 = vmatmul.bf16.gmra.mxu0 %v91
  %v115 = vpop.f32.mrf.mxu0
  %v116 = vadd.f32 %v41, %v115
  %v117 = vpop.f32.mrf.mxu0
  %v118 = vadd.f32 %v41, %v117
  %119 = vmatmul.bf16.gmra.mxu0 %v94
  %v120 = vpop.f32.mrf.mxu0
  %v121 = vadd.f32 %v41, %v120
  %v122 = vpop.f32.mrf.mxu0
  %v123 = vadd.f32 %v41, %v122
  %124 = vdwg.mxu0
  %125 = vmatpush.bf16.msra.mxu0 0
  %126 = vmatpush.bf16.msra.mxu0 0
  %127 = vmatpush.bf16.msra.mxu0 0
  %128 = vmatpush.bf16.msra.mxu0 0
  %129 = vmatpush.bf16.msra.mxu0 0
  %130 = vmatpush.bf16.msra.mxu0 0
  %131 = vmatpush.bf16.msra.mxu0 0
  %132 = vmatpush.bf16.msra.mxu0 %v78
  %133 = vmatmul.bf16.gmra.mxu0 %v85
  %v134 = vpop.f32.mrf.mxu0
  %v135 = vadd.f32 %v42, %v134
  %v136 = vpop.f32.mrf.mxu0
  %v137 = vadd.f32 %v42, %v136
  %138 = vmatmul.bf16.gmra.mxu0 %v88
  %v139 = vpop.f32.mrf.mxu0
  %v140 = vadd.f32 %v42, %v139
  %v141 = vpop.f32.mrf.mxu0
  %v142 = vadd.f32 %v42, %v141
  %143 = vmatmul.bf16.gmra.mxu0 %v91
  %v144 = vpop.f32.mrf.mxu0
  %v145 = vadd.f32 %v42, %v144
  %v146 = vpop.f32.mrf.mxu0
  %v147 = vadd.f32 %v42, %v146
  %148 = vmatmul.bf16.gmra.mxu0 %v94
  %v149 = vpop.f32.mrf.mxu0
  %v150 = vadd.f32 %v42, %v149
  %v151 = vpop.f32.mrf.mxu0
  %v152 = vadd.f32 %v42, %v151
  %153 = vdwg.mxu0
  %154 = vmatpush.bf16.msra.mxu0 0
  %155 = vmatpush.bf16.msra.mxu0 0
  %156 = vmatpush.bf16.msra.mxu0 0
  %157 = vmatpush.bf16.msra.mxu0 0
  %158 = vmatpush.bf16.msra.mxu0 0
  %159 = vmatpush.bf16.msra.mxu0 0
  %160 = vmatpush.bf16.msra.mxu0 0
  %161 = vmatpush.bf16.msra.mxu0 %v79
  %162 = vmatmul.bf16.gmra.mxu0 %v85
  %v163 = vpop.f32.mrf.mxu0
  %v164 = vadd.f32 %v43, %v163
  %v165 = vpop.f32.mrf.mxu0
  %v166 = vadd.f32 %v43, %v165
  %167 = vmatmul.bf16.gmra.mxu0 %v88
  %v168 = vpop.f32.mrf.mxu0
  %v169 = vadd.f32 %v43, %v168
  %v170 = vpop.f32.mrf.mxu0
  %v171 = vadd.f32 %v43, %v170
  %172 = vmatmul.bf16.gmra.mxu0 %v91
  %v173 = vpop.f32.mrf.mxu0
  %v174 = vadd.f32 %v43, %v173
  %v175 = vpop.f32.mrf.mxu0
  %v176 = vadd.f32 %v43, %v175
  %177 = vmatmul.bf16.gmra.mxu0 %v94
  %v178 = vpop.f32.mrf.mxu0
  %v179 = vadd.f32 %v43, %v178
  %v180 = vpop.f32.mrf.mxu0
  %v181 = vadd.f32 %v43, %v180
  %182 = vdwg.mxu0
  %183 = vst [vmem:[#allocation2] sm:$0xff] %v106
  %184 = vst [vmem:[#allocation2 + $0x8] sm:$0xff] %v135
  %185 = vst [vmem:[#allocation2 + $0x10] sm:$0xff] %v164
  %186 = vst [vmem:[#allocation2 + $0x18] sm:$0xff] %v108
  %187 = vst [vmem:[#allocation2 + $0x20] sm:$0xff] %v137
  %188 = vst [vmem:[#allocation2 + $0x28] sm:$0xff] %v166
  %189 = vst [vmem:[#allocation2 + $0x30] sm:$0xff] %v111
  %190 = vst [vmem:[#allocation2 + $0x38] sm:$0xff] %v140
  %191 = vst [vmem:[#allocation2 + $0x40] sm:$0xff] %v169
  %192 = vst [vmem:[#allocation2 + $0x48] sm:$0xff] %v113
  %193 = vst [vmem:[#allocation2 + $0x50] sm:$0xff] %v142
  %194 = vst [vmem:[#allocation2 + $0x58] sm:$0xff] %v171
  %195 = vst [vmem:[#allocation2 + $0x60] sm:$0xff] %v116
  %196 = vst [vmem:[#allocation2 + $0x68] sm:$0xff] %v145
  %197 = vst [vmem:[#allocation2 + $0x70] sm:$0xff] %v174
  %198 = vst [vmem:[#allocation2 + $0x78] sm:$0xff] %v118
  %199 = vst [vmem:[#allocation2 + $0x80] sm:$0xff] %v147
  %200 = vst [vmem:[#allocation2 + $0x88] sm:$0xff] %v176
  %201 = vst [vmem:[#allocation2 + $0x90] sm:$0xff] %v121
  %202 = vst [vmem:[#allocation2 + $0x98] sm:$0xff] %v150
  %203 = vst [vmem:[#allocation2 + $0xa0] sm:$0xff] %v179
  %204 = vst [vmem:[#allocation2 + $0xa8] sm:$0xff] %v123
  %205 = vst [vmem:[#allocation2 + $0xb0] sm:$0xff] %v152
  %206 = vst [vmem:[#allocation2 + $0xb8] sm:$0xff] %v181
  %v207 = vld [vmem:[%s3] sm:$0xff]
  %v208 = vld [vmem:[%s3 + $0x8] sm:$0xf]
  %v209 = vld [vmem:[%s3 + $0xc] sm:$0xff]
  %v210 = vld [vmem:[%s3 + $0x14] sm:$0xf]
  %v211 = vld [vmem:[%s3 + $0x18] sm:$0xff]
  %v212 = vld [vmem:[%s3 + $0x20] sm:$0xf]
  %v213 = vld [vmem:[%s3 + $0x24] sm:$0xff]
  %v214 = vld [vmem:[%s3 + $0x2c] sm:$0xf]
  %v215 = vld [vmem:[%s3 + $0x30] sm:$0xff]
  %v216 = vld [vmem:[%s3 + $0x38] sm:$0xf]
  %v217 = vld [vmem:[%s3 + $0x3c] sm:$0xff]
  %v218 = vld [vmem:[%s3 + $0x44] sm:$0xf]
  %v219 = vld [vmem:[%s3 + $0x48] sm:$0xff]
  %v220 = vld [vmem:[%s3 + $0x50] sm:$0xf]
  %v221 = vld [vmem:[%s3 + $0x54] sm:$0xff]
  %v222 = vld [vmem:[%s3 + $0x5c] sm:$0xf]
  %v223 = vld [vmem:[%s3 + $0x60] sm:$0xff]
  %v224 = vld [vmem:[%s3 + $0x68] sm:$0xf]
  %v225 = vld [vmem:[%s3 + $0x6c] sm:$0xff]
  %v226 = vld [vmem:[%s3 + $0x74] sm:$0xf]
  %v227 = vld [vmem:[%s3 + $0x78] sm:$0xff]
  %v228 = vld [vmem:[%s3 + $0x80] sm:$0xf]
  %v229 = vld [vmem:[%s3 + $0x84] sm:$0xff]
  %v230 = vld [vmem:[%s3 + $0x8c] sm:$0xf]
  %v231 = vld [vmem:[%s3 + $0x90] sm:$0xff]
  %v232 = vld [vmem:[%s3 + $0x98] sm:$0xf]
  %v233 = vld [vmem:[%s3 + $0x9c] sm:$0xff]
  %v234 = vld [vmem:[%s3 + $0xa4] sm:$0xf]
  %v235 = vld [vmem:[%s3 + $0xa8] sm:$0xff]
  %v236 = vld [vmem:[%s3 + $0xb0] sm:$0xf]
  %v237 = vld [vmem:[%s3 + $0xb4] sm:$0xff]
  %v238 = vld [vmem:[%s3 + $0xbc] sm:$0xf]
  %v239 = vld [vmem:[%s4] sm:$0x1]
  %v241 = vperm.slane %v239, 0
  %v243 = vlaneseq
  %v244 = vand.u32 %v243, 127
  %v245 = vadd.s32 %v244, 128
  %v246 = vadd.s32 %v244, 256
  %vm247 = vcmp.lt.s32.totalorder %v244, 0
  %v248 = vsub.s32 0, %v244
  %v249 = vsel %vm247, %v248, %v244
  %v250 = vshrl.u32 %v249, 7
  %v251 = vand.u32 %v249, 127
  %v252 = vsub.s32 0, %v251
  %v253 = vsel %vm247, %v252, %v251
  %vm254 = vcmp.lt.s32.totalorder %v245, 0
  %v255 = vsub.s32 0, %v245
  %v256 = vsel %vm254, %v255, %v245
  %v257 = vshrl.u32 %v256, 7
  %v258 = vand.u32 %v256, 127
  %v259 = vsub.s32 0, %v258
  %v260 = vsel %vm254, %v259, %v258
  %vm261 = vcmp.lt.s32.totalorder %v246, 0
  %v262 = vsub.s32 0, %v246
  %v263 = vsel %vm261, %v262, %v246
  %v264 = vshrl.u32 %v263, 7
  %v265 = vand.u32 %v263, 127
  %v266 = vsub.s32 0, %v265
  %v267 = vsel %vm261, %v266, %v265
  %vm268 = vcmp.ne.s32.totalorder %v253, 0
  %vm269 = vcmp.ne.s32.totalorder %v260, 0
  %vm270 = vcmp.ne.s32.totalorder %v267, 0
  %vm271 = vcmp.lt.s32.totalorder %v253, 0
  %vm272 = vcmp.lt.s32.totalorder %v260, 0
  %vm273 = vcmp.lt.s32.totalorder %v267, 0
  %vm274 = vmand %vm271, %vm268
  %vm275 = vmand %vm272, %vm269
  %vm276 = vmand %vm273, %vm270
  %v277 = vadd.s32 %v253, 128
  %v278 = vadd.s32 %v260, 128
  %v279 = vadd.s32 %v267, 128
  %v280 = vsel %vm274, %v277, %v253
  %v281 = vsel %vm275, %v278, %v260
  %v282 = vsel %vm276, %v279, %v267
  %vm283 = vcmp.lt.s32.totalorder %v280, 32
  %vm284 = vcmp.lt.s32.totalorder %v281, 32
  %vm285 = vcmp.lt.s32.totalorder %v282, 32
  %v286 = vld [vmem:[#allocation2] sm:$0xff]
  %v287 = vld [vmem:[#allocation2 + $0x8] sm:$0xff]
  %v288 = vld [vmem:[#allocation2 + $0x10] sm:$0xff]
  %v289 = vld [vmem:[#allocation2 + $0xa8] sm:$0xff]
  %v290 = vld [vmem:[#allocation2 + $0xb0] sm:$0xff]
  %v291 = vld [vmem:[#allocation2 + $0xb8] sm:$0xff]
  %v292 = vsel %vm283, %v286, %v289
  %v293 = vsel %vm284, %v287, %v290
  %v294 = vsel %vm285, %v288, %v291
  %v327 = vunpack.c.l.b16 %v207
  %v328 = vunpack.c.h.b16 %v207
  %v329 = vunpack.c.l.b16 %v208
  %v330 = vunpack.c.l.b16 %v209
  %v331 = vunpack.c.h.b16 %v209
  %v332 = vunpack.c.l.b16 %v210
  %v333 = vunpack.c.l.b16 %v211
  %v334 = vunpack.c.h.b16 %v211
  %v335 = vunpack.c.l.b16 %v212
  %v336 = vunpack.c.l.b16 %v213
  %v337 = vunpack.c.h.b16 %v213
  %v338 = vunpack.c.l.b16 %v214
  %v339 = vunpack.c.l.b16 %v215
  %v340 = vunpack.c.h.b16 %v215
  %v341 = vunpack.c.l.b16 %v216
  %v342 = vunpack.c.l.b16 %v217
  %v343 = vunpack.c.h.b16 %v217
  %v344 = vunpack.c.l.b16 %v218
  %v345 = vunpack.c.l.b16 %v219
  %v346 = vunpack.c.h.b16 %v219
  %v347 = vunpack.c.l.b16 %v220
  %v348 = vunpack.c.l.b16 %v221
  %v349 = vunpack.c.h.b16 %v221
  %v350 = vunpack.c.l.b16 %v222
  %v351 = vunpack.c.l.b16 %v223
  %v352 = vunpack.c.h.b16 %v223
  %v353 = vunpack.c.l.b16 %v224
  %v354 = vunpack.c.l.b16 %v225
  %v355 = vunpack.c.h.b16 %v225
  %v356 = vunpack.c.l.b16 %v226
  %v357 = vunpack.c.l.b16 %v227
  %v358 = vunpack.c.h.b16 %v227
  %v359 = vunpack.c.l.b16 %v228
  %v360 = vunpack.c.l.b16 %v229
  %v361 = vunpack.c.h.b16 %v229
  %v362 = vunpack.c.l.b16 %v230
  %v363 = vunpack.c.l.b16 %v231
  %v364 = vunpack.c.h.b16 %v231
  %v365 = vunpack.c.l.b16 %v232
  %v366 = vunpack.c.l.b16 %v233
  %v367 = vunpack.c.h.b16 %v233
  %v368 = vunpack.c.l.b16 %v234
  %v369 = vunpack.c.l.b16 %v235
  %v370 = vunpack.c.h.b16 %v235
  %v371 = vunpack.c.l.b16 %v236
  %v372 = vunpack.c.l.b16 %v237
  %v373 = vunpack.c.h.b16 %v237
  %v374 = vunpack.c.l.b16 %v238
  %v375 = vpack.c.b16 %v330, %v327
  %v376 = vpack.c.b16 %v331, %v328
  %v377 = vpack.c.b16 %v332, %v329
  %v378 = vpack.c.b16 %v336, %v333
  %v379 = vpack.c.b16 %v337, %v334
  %v380 = vpack.c.b16 %v338, %v335
  %v381 = vpack.c.b16 %v342, %v339
  %v382 = vpack.c.b16 %v343, %v340
  %v383 = vpack.c.b16 %v344, %v341
  %v384 = vpack.c.b16 %v348, %v345
  %v385 = vpack.c.b16 %v349, %v346
  %v386 = vpack.c.b16 %v350, %v347
  %v387 = vpack.c.b16 %v354, %v351
  %v388 = vpack.c.b16 %v355, %v352
  %v389 = vpack.c.b16 %v356, %v353
  %v390 = vpack.c.b16 %v360, %v357
  %v391 = vpack.c.b16 %v361, %v358
  %v392 = vpack.c.b16 %v362, %v359
  %v393 = vpack.c.b16 %v366, %v363
  %v394 = vpack.c.b16 %v367, %v364
  %v395 = vpack.c.b16 %v368, %v365
  %v396 = vpack.c.b16 %v372, %v369
  %v397 = vpack.c.b16 %v373, %v370
  %v398 = vpack.c.b16 %v374, %v371
  %423 = vmatpush.bf16.msra.mxu0 %v396
  %424 = vmatpush.bf16.msra.mxu0 %v393
  %425 = vmatpush.bf16.msra.mxu0 %v390
  %426 = vmatpush.bf16.msra.mxu0 %v387
  %427 = vmatpush.bf16.msra.mxu0 %v384
  %428 = vmatpush.bf16.msra.mxu0 %v381
  %429 = vmatpush.bf16.msra.mxu0 %v378
  %430 = vmatpush.bf16.msra.mxu0 %v375
  %431 = vmatmul.bf16.gmra.mxu0 0
  %v432 = vpop.f32.mrf.mxu0
  %v433 = vadd.f32 0.0, %v432
  %v434 = vpop.f32.mrf.mxu0
  %435 = vdwg.mxu0
  %436 = vmatpush.bf16.msra.mxu0 %v397
  %437 = vmatpush.bf16.msra.mxu0 %v394
  %438 = vmatpush.bf16.msra.mxu0 %v391
  %439 = vmatpush.bf16.msra.mxu0 %v388
  %440 = vmatpush.bf16.msra.mxu0 %v385
  %441 = vmatpush.bf16.msra.mxu0 %v382
  %442 = vmatpush.bf16.msra.mxu0 %v379
  %443 = vmatpush.bf16.msra.mxu0 %v376
  %444 = vmatmul.bf16.gmra.mxu0 0
  %v445 = vpop.f32.mrf.mxu0
  %v446 = vadd.f32 0.0, %v445
  %v447 = vpop.f32.mrf.mxu0
  %448 = vdwg.mxu0
  %449 = vmatpush.bf16.msra.mxu0 %v398
  %450 = vmatpush.bf16.msra.mxu0 %v395
  %451 = vmatpush.bf16.msra.mxu0 %v392
  %452 = vmatpush.bf16.msra.mxu0 %v389
  %453 = vmatpush.bf16.msra.mxu0 %v386
  %454 = vmatpush.bf16.msra.mxu0 %v383
  %455 = vmatpush.bf16.msra.mxu0 %v380
  %456 = vmatpush.bf16.msra.mxu0 %v377
  %457 = vmatmul.bf16.gmra.mxu0 0
  %v458 = vpop.f32.mrf.mxu0
  %v459 = vadd.f32 0.0, %v458
  %v460 = vpop.f32.mrf.mxu0
  %461 = vdwg.mxu0
  %v462 = vadd.f32 %v292, %v433
  %v463 = vxor.u32 %v462, 2147483648
  %v464 = vmul.f32 %v463, 1.442695
  %v465 = vpow.pop %v464
  %v466 = vadd.f32 %v465, 1.0
  %v467 = vrcp.pop %v466
  %v468 = vmul.f32 %v466, %v467
  %v469 = vsub.f32 1.0, %v468
  %v470 = vmul.f32 %v467, %v469
  %v471 = vadd.f32 %v467, %v470
  %vm472 = vweird.f32 %v466
  %vm473 = vweird.f32 %v467
  %vm474 = vmor %vm472, %vm473
  %v475 = vsel %vm474, %v467, %v471
  %v476 = vand.u32 2147483647, %v466
  %vm477 = vcmp.eq.f32.partialorder %v476, 8.507059e+37
  %v478 = vand.u32 %v466, 2147483648
  %v479 = vor.u32 1.1754944e-38, %v478
  %v480 = vsel %vm477, %v479, %v475
  %v481 = vmul.f32 1.0, %v480
  %v482 = vadd.f32 %v293, %v446
  %v483 = vxor.u32 %v482, 2147483648
  %v484 = vmul.f32 %v483, 1.442695
  %v485 = vpow.pop %v484
  %v486 = vadd.f32 %v485, 1.0
  %v487 = vrcp.pop %v486
  %v488 = vmul.f32 %v486, %v487
  %v489 = vsub.f32 1.0, %v488
  %v490 = vmul.f32 %v487, %v489
  %v491 = vadd.f32 %v487, %v490
  %vm492 = vweird.f32 %v486
  %vm493 = vweird.f32 %v487
  %vm494 = vmor %vm492, %vm493
  %v495 = vsel %vm494, %v487, %v491
  %v496 = vand.u32 2147483647, %v486
  %vm497 = vcmp.eq.f32.partialorder %v496, 8.507059e+37
  %v498 = vand.u32 %v486, 2147483648
  %v499 = vor.u32 1.1754944e-38, %v498
  %v500 = vsel %vm497, %v499, %v495
  %v501 = vmul.f32 1.0, %v500
  %v502 = vadd.f32 %v459, %v241
  %v503 = vmul.f32 %v481, %v502
  %v504 = vadd.f32 %v294, %v503
  %v505 = vtanh.pop %v504
  %v506 = vsub.f32 1.0, %v501
  %v507 = vmul.f32 %v506, %v505
  %v508 = vmul.f32 %v501, 0.0
  %v509 = vadd.f32 %v507, %v508
  %v510 = vld [vmem:[#allocation2 + $0x18] sm:$0xff]
  %v511 = vld [vmem:[#allocation2 + $0x20] sm:$0xff]
  %v512 = vld [vmem:[#allocation2 + $0x28] sm:$0xff]
  %v513 = vld [vmem:[#allocation2 + $0x90] sm:$0xff]
  %v514 = vld [vmem:[#allocation2 + $0x98] sm:$0xff]
  %v515 = vld [vmem:[#allocation2 + $0xa0] sm:$0xff]
  %v516 = vsel %vm283, %v510, %v513
  %v517 = vsel %vm284, %v511, %v514
  %v518 = vsel %vm285, %v512, %v515
  %v519 = vpack.c.bf16 %v509, %v509
  %520 = vmatpush.bf16.msra.mxu0 %v396
  %521 = vmatpush.bf16.msra.mxu0 %v393
  %522 = vmatpush.bf16.msra.mxu0 %v390
  %523 = vmatpush.bf16.msra.mxu0 %v387
  %524 = vmatpush.bf16.msra.mxu0 %v384
  %525 = vmatpush.bf16.msra.mxu0 %v381
  %526 = vmatpush.bf16.msra.mxu0 %v378
  %527 = vmatpush.bf16.msra.mxu0 %v375
  %528 = vmatmul.bf16.gmra.mxu0 %v519
  %v529 = vpop.f32.mrf.mxu0
  %v530 = vadd.f32 0.0, %v529
  %v531 = vpop.f32.mrf.mxu0
  %532 = vdwg.mxu0
  %533 = vmatpush.bf16.msra.mxu0 %v397
  %534 = vmatpush.bf16.msra.mxu0 %v394
  %535 = vmatpush.bf16.msra.mxu0 %v391
  %536 = vmatpush.bf16.msra.mxu0 %v388
  %537 = vmatpush.bf16.msra.mxu0 %v385
  %538 = vmatpush.bf16.msra.mxu0 %v382
  %539 = vmatpush.bf16.msra.mxu0 %v379
  %540 = vmatpush.bf16.msra.mxu0 %v376
  %541 = vmatmul.bf16.gmra.mxu0 %v519
  %v542 = vpop.f32.mrf.mxu0
  %v543 = vadd.f32 0.0, %v542
  %v544 = vpop.f32.mrf.mxu0
  %545 = vdwg.mxu0
  %546 = vmatpush.bf16.msra.mxu0 %v398
  %547 = vmatpush.bf16.msra.mxu0 %v395
  %548 = vmatpush.bf16.msra.mxu0 %v392
  %549 = vmatpush.bf16.msra.mxu0 %v389
  %550 = vmatpush.bf16.msra.mxu0 %v386
  %551 = vmatpush.bf16.msra.mxu0 %v383
  %552 = vmatpush.bf16.msra.mxu0 %v380
  %553 = vmatpush.bf16.msra.mxu0 %v377
  %554 = vmatmul.bf16.gmra.mxu0 %v519
  %v555 = vpop.f32.mrf.mxu0
  %v556 = vadd.f32 0.0, %v555
  %v557 = vpop.f32.mrf.mxu0
  %558 = vdwg.mxu0
  %v559 = vadd.f32 %v516, %v530
  %v560 = vxor.u32 %v559, 2147483648
  %v561 = vmul.f32 %v560, 1.442695
  %v562 = vpow.pop %v561
  %v563 = vadd.f32 %v562, 1.0
  %v564 = vrcp.pop %v563
  %v565 = vmul.f32 %v563, %v564
  %v566 = vsub.f32 1.0, %v565
  %v567 = vmul.f32 %v564, %v566
  %v568 = vadd.f32 %v564, %v567
  %vm569 = vweird.f32 %v563
  %vm570 = vweird.f32 %v564
  %vm571 = vmor %vm569, %vm570
  %v572 = vsel %vm571, %v564, %v568
  %v573 = vand.u32 2147483647, %v563
  %vm574 = vcmp.eq.f32.partialorder %v573, 8.507059e+37
  %v575 = vand.u32 %v563, 2147483648
  %v576 = vor.u32 1.1754944e-38, %v575
  %v577 = vsel %vm574, %v576, %v572
  %v578 = vmul.f32 1.0, %v577
  %v579 = vadd.f32 %v517, %v543
  %v580 = vxor.u32 %v579, 2147483648
  %v581 = vmul.f32 %v580, 1.442695
  %v582 = vpow.pop %v581
  %v583 = vadd.f32 %v582, 1.0
  %v584 = vrcp.pop %v583
  %v585 = vmul.f32 %v583, %v584
  %v586 = vsub.f32 1.0, %v585
  %v587 = vmul.f32 %v584, %v586
  %v588 = vadd.f32 %v584, %v587
  %vm589 = vweird.f32 %v583
  %vm590 = vweird.f32 %v584
  %vm591 = vmor %vm589, %vm590
  %v592 = vsel %vm591, %v584, %v588
  %v593 = vand.u32 2147483647, %v583
  %vm594 = vcmp.eq.f32.partialorder %v593, 8.507059e+37
  %v595 = vand.u32 %v583, 2147483648
  %v596 = vor.u32 1.1754944e-38, %v595
  %v597 = vsel %vm594, %v596, %v592
  %v598 = vmul.f32 1.0, %v597
  %v599 = vadd.f32 %v556, %v241
  %v600 = vmul.f32 %v578, %v599
  %v601 = vadd.f32 %v518, %v600
  %v602 = vtanh.pop %v601
  %v603 = vsub.f32 1.0, %v598
  %v604 = vmul.f32 %v603, %v602
  %v605 = vmul.f32 %v598, %v509
  %v606 = vadd.f32 %v604, %v605
  %v607 = vld [vmem:[#allocation2 + $0x30] sm:$0xff]
  %v608 = vld [vmem:[#allocation2 + $0x38] sm:$0xff]
  %v609 = vld [vmem:[#allocation2 + $0x40] sm:$0xff]
  %v610 = vld [vmem:[#allocation2 + $0x78] sm:$0xff]
  %v611 = vld [vmem:[#allocation2 + $0x80] sm:$0xff]
  %v612 = vld [vmem:[#allocation2 + $0x88] sm:$0xff]
  %v613 = vsel %vm283, %v607, %v610
  %v614 = vsel %vm284, %v608, %v611
  %v615 = vsel %vm285, %v609, %v612
  %v616 = vpack.c.bf16 %v606, %v606
  %617 = vmatpush.bf16.msra.mxu0 %v396
  %618 = vmatpush.bf16.msra.mxu0 %v393
  %619 = vmatpush.bf16.msra.mxu0 %v390
  %620 = vmatpush.bf16.msra.mxu0 %v387
  %621 = vmatpush.bf16.msra.mxu0 %v384
  %622 = vmatpush.bf16.msra.mxu0 %v381
  %623 = vmatpush.bf16.msra.mxu0 %v378
  %624 = vmatpush.bf16.msra.mxu0 %v375
  %625 = vmatmul.bf16.gmra.mxu0 %v616
  %v626 = vpop.f32.mrf.mxu0
  %v627 = vadd.f32 0.0, %v626
  %v628 = vpop.f32.mrf.mxu0
  %629 = vdwg.mxu0
  %630 = vmatpush.bf16.msra.mxu0 %v397
  %631 = vmatpush.bf16.msra.mxu0 %v394
  %632 = vmatpush.bf16.msra.mxu0 %v391
  %633 = vmatpush.bf16.msra.mxu0 %v388
  %634 = vmatpush.bf16.msra.mxu0 %v385
  %635 = vmatpush.bf16.msra.mxu0 %v382
  %636 = vmatpush.bf16.msra.mxu0 %v379
  %637 = vmatpush.bf16.msra.mxu0 %v376
  %638 = vmatmul.bf16.gmra.mxu0 %v616
  %v639 = vpop.f32.mrf.mxu0
  %v640 = vadd.f32 0.0, %v639
  %v641 = vpop.f32.mrf.mxu0
  %642 = vdwg.mxu0
  %643 = vmatpush.bf16.msra.mxu0 %v398
  %644 = vmatpush.bf16.msra.mxu0 %v395
  %645 = vmatpush.bf16.msra.mxu0 %v392
  %646 = vmatpush.bf16.msra.mxu0 %v389
  %647 = vmatpush.bf16.msra.mxu0 %v386
  %648 = vmatpush.bf16.msra.mxu0 %v383
  %649 = vmatpush.bf16.msra.mxu0 %v380
  %650 = vmatpush.bf16.msra.mxu0 %v377
  %651 = vmatmul.bf16.gmra.mxu0 %v616
  %v652 = vpop.f32.mrf.mxu0
  %v653 = vadd.f32 0.0, %v652
  %v654 = vpop.f32.mrf.mxu0
  %655 = vdwg.mxu0
  %v656 = vadd.f32 %v613, %v627
  %v657 = vxor.u32 %v656, 2147483648
  %v658 = vmul.f32 %v657, 1.442695
  %v659 = vpow.pop %v658
  %v660 = vadd.f32 %v659, 1.0
  %v661 = vrcp.pop %v660
  %v662 = vmul.f32 %v660, %v661
  %v663 = vsub.f32 1.0, %v662
  %v664 = vmul.f32 %v661, %v663
  %v665 = vadd.f32 %v661, %v664
  %vm666 = vweird.f32 %v660
  %vm667 = vweird.f32 %v661
  %vm668 = vmor %vm666, %vm667
  %v669 = vsel %vm668, %v661, %v665
  %v670 = vand.u32 2147483647, %v660
  %vm671 = vcmp.eq.f32.partialorder %v670, 8.507059e+37
  %v672 = vand.u32 %v660, 2147483648
  %v673 = vor.u32 1.1754944e-38, %v672
  %v674 = vsel %vm671, %v673, %v669
  %v675 = vmul.f32 1.0, %v674
  %v676 = vadd.f32 %v614, %v640
  %v677 = vxor.u32 %v676, 2147483648
  %v678 = vmul.f32 %v677, 1.442695
  %v679 = vpow.pop %v678
  %v680 = vadd.f32 %v679, 1.0
  %v681 = vrcp.pop %v680
  %v682 = vmul.f32 %v680, %v681
  %v683 = vsub.f32 1.0, %v682
  %v684 = vmul.f32 %v681, %v683
  %v685 = vadd.f32 %v681, %v684
  %vm686 = vweird.f32 %v680
  %vm687 = vweird.f32 %v681
  %vm688 = vmor %vm686, %vm687
  %v689 = vsel %vm688, %v681, %v685
  %v690 = vand.u32 2147483647, %v680
  %vm691 = vcmp.eq.f32.partialorder %v690, 8.507059e+37
  %v692 = vand.u32 %v680, 2147483648
  %v693 = vor.u32 1.1754944e-38, %v692
  %v694 = vsel %vm691, %v693, %v689
  %v695 = vmul.f32 1.0, %v694
  %v696 = vadd.f32 %v653, %v241
  %v697 = vmul.f32 %v675, %v696
  %v698 = vadd.f32 %v615, %v697
  %v699 = vtanh.pop %v698
  %v700 = vsub.f32 1.0, %v695
  %v701 = vmul.f32 %v700, %v699
  %v702 = vmul.f32 %v695, %v606
  %v703 = vadd.f32 %v701, %v702
  %v704 = vld [vmem:[#allocation2 + $0x48] sm:$0xff]
  %v705 = vld [vmem:[#allocation2 + $0x50] sm:$0xff]
  %v706 = vld [vmem:[#allocation2 + $0x58] sm:$0xff]
  %v707 = vld [vmem:[#allocation2 + $0x60] sm:$0xff]
  %v708 = vld [vmem:[#allocation2 + $0x68] sm:$0xff]
  %v709 = vld [vmem:[#allocation2 + $0x70] sm:$0xff]
  %v710 = vsel %vm283, %v704, %v707
  %v711 = vsel %vm284, %v705, %v708
  %v712 = vsel %vm285, %v706, %v709
  %v713 = vpack.c.bf16 %v703, %v703
  %714 = vmatpush.bf16.msra.mxu0 %v396
  %715 = vmatpush.bf16.msra.mxu0 %v393
  %716 = vmatpush.bf16.msra.mxu0 %v390
  %717 = vmatpush.bf16.msra.mxu0 %v387
  %718 = vmatpush.bf16.msra.mxu0 %v384
  %719 = vmatpush.bf16.msra.mxu0 %v381
  %720 = vmatpush.bf16.msra.mxu0 %v378
  %721 = vmatpush.bf16.msra.mxu0 %v375
  %722 = vmatmul.bf16.gmra.mxu0 %v713
  %v723 = vpop.f32.mrf.mxu0
  %v724 = vadd.f32 0.0, %v723
  %v725 = vpop.f32.mrf.mxu0
  %726 = vdwg.mxu0
  %727 = vmatpush.bf16.msra.mxu0 %v397
  %728 = vmatpush.bf16.msra.mxu0 %v394
  %729 = vmatpush.bf16.msra.mxu0 %v391
  %730 = vmatpush.bf16.msra.mxu0 %v388
  %731 = vmatpush.bf16.msra.mxu0 %v385
  %732 = vmatpush.bf16.msra.mxu0 %v382
  %733 = vmatpush.bf16.msra.mxu0 %v379
  %734 = vmatpush.bf16.msra.mxu0 %v376
  %735 = vmatmul.bf16.gmra.mxu0 %v713
  %v736 = vpop.f32.mrf.mxu0
  %v737 = vadd.f32 0.0, %v736
  %v738 = vpop.f32.mrf.mxu0
  %739 = vdwg.mxu0
  %740 = vmatpush.bf16.msra.mxu0 %v398
  %741 = vmatpush.bf16.msra.mxu0 %v395
  %742 = vmatpush.bf16.msra.mxu0 %v392
  %743 = vmatpush.bf16.msra.mxu0 %v389
  %744 = vmatpush.bf16.msra.mxu0 %v386
  %745 = vmatpush.bf16.msra.mxu0 %v383
  %746 = vmatpush.bf16.msra.mxu0 %v380
  %747 = vmatpush.bf16.msra.mxu0 %v377
  %748 = vmatmul.bf16.gmra.mxu0 %v713
  %v749 = vpop.f32.mrf.mxu0
  %v750 = vadd.f32 0.0, %v749
  %v751 = vpop.f32.mrf.mxu0
  %752 = vdwg.mxu0
  %v753 = vadd.f32 %v710, %v724
  %v754 = vxor.u32 %v753, 2147483648
  %v755 = vmul.f32 %v754, 1.442695
  %v756 = vpow.pop %v755
  %v757 = vadd.f32 %v756, 1.0
  %v758 = vrcp.pop %v757
  %v759 = vmul.f32 %v757, %v758
  %v760 = vsub.f32 1.0, %v759
  %v761 = vmul.f32 %v758, %v760
  %v762 = vadd.f32 %v758, %v761
  %vm763 = vweird.f32 %v757
  %vm764 = vweird.f32 %v758
  %vm765 = vmor %vm763, %vm764
  %v766 = vsel %vm765, %v758, %v762
  %v767 = vand.u32 2147483647, %v757
  %vm768 = vcmp.eq.f32.partialorder %v767, 8.507059e+37
  %v769 = vand.u32 %v757, 2147483648
  %v770 = vor.u32 1.1754944e-38, %v769
  %v771 = vsel %vm768, %v770, %v766
  %v772 = vmul.f32 1.0, %v771
  %v773 = vadd.f32 %v711, %v737
  %v774 = vxor.u32 %v773, 2147483648
  %v775 = vmul.f32 %v774, 1.442695
  %v776 = vpow.pop %v775
  %v777 = vadd.f32 %v776, 1.0
  %v778 = vrcp.pop %v777
  %v779 = vmul.f32 %v777, %v778
  %v780 = vsub.f32 1.0, %v779
  %v781 = vmul.f32 %v778, %v780
  %v782 = vadd.f32 %v778, %v781
  %vm783 = vweird.f32 %v777
  %vm784 = vweird.f32 %v778
  %vm785 = vmor %vm783, %vm784
  %v786 = vsel %vm785, %v778, %v782
  %v787 = vand.u32 2147483647, %v777
  %vm788 = vcmp.eq.f32.partialorder %v787, 8.507059e+37
  %v789 = vand.u32 %v777, 2147483648
  %v790 = vor.u32 1.1754944e-38, %v789
  %v791 = vsel %vm788, %v790, %v786
  %v792 = vmul.f32 1.0, %v791
  %v793 = vadd.f32 %v750, %v241
  %v794 = vmul.f32 %v772, %v793
  %v795 = vadd.f32 %v712, %v794
  %v796 = vtanh.pop %v795
  %v797 = vsub.f32 1.0, %v792
  %v798 = vmul.f32 %v797, %v796
  %v799 = vmul.f32 %v792, %v703
  %v800 = vadd.f32 %v798, %v799
  %v801 = vsel %vm283, %v707, %v704
  %v802 = vsel %vm284, %v708, %v705
  %v803 = vsel %vm285, %v709, %v706
  %v804 = vpack.c.bf16 %v800, %v800
  %805 = vmatpush.bf16.msra.mxu0 %v396
  %806 = vmatpush.bf16.msra.mxu0 %v393
  %807 = vmatpush.bf16.msra.mxu0 %v390
  %808 = vmatpush.bf16.msra.mxu0 %v387
  %809 = vmatpush.bf16.msra.mxu0 %v384
  %810 = vmatpush.bf16.msra.mxu0 %v381
  %811 = vmatpush.bf16.msra.mxu0 %v378
  %812 = vmatpush.bf16.msra.mxu0 %v375
  %813 = vmatmul.bf16.gmra.mxu0 %v804
  %v814 = vpop.f32.mrf.mxu0
  %v815 = vadd.f32 0.0, %v814
  %v816 = vpop.f32.mrf.mxu0
  %817 = vdwg.mxu0
  %818 = vmatpush.bf16.msra.mxu0 %v397
  %819 = vmatpush.bf16.msra.mxu0 %v394
  %820 = vmatpush.bf16.msra.mxu0 %v391
  %821 = vmatpush.bf16.msra.mxu0 %v388
  %822 = vmatpush.bf16.msra.mxu0 %v385
  %823 = vmatpush.bf16.msra.mxu0 %v382
  %824 = vmatpush.bf16.msra.mxu0 %v379
  %825 = vmatpush.bf16.msra.mxu0 %v376
  %826 = vmatmul.bf16.gmra.mxu0 %v804
  %v827 = vpop.f32.mrf.mxu0
  %v828 = vadd.f32 0.0, %v827
  %v829 = vpop.f32.mrf.mxu0
  %830 = vdwg.mxu0
  %831 = vmatpush.bf16.msra.mxu0 %v398
  %832 = vmatpush.bf16.msra.mxu0 %v395
  %833 = vmatpush.bf16.msra.mxu0 %v392
  %834 = vmatpush.bf16.msra.mxu0 %v389
  %835 = vmatpush.bf16.msra.mxu0 %v386
  %836 = vmatpush.bf16.msra.mxu0 %v383
  %837 = vmatpush.bf16.msra.mxu0 %v380
  %838 = vmatpush.bf16.msra.mxu0 %v377
  %839 = vmatmul.bf16.gmra.mxu0 %v804
  %v840 = vpop.f32.mrf.mxu0
  %v841 = vadd.f32 0.0, %v840
  %v842 = vpop.f32.mrf.mxu0
  %843 = vdwg.mxu0
  %v844 = vadd.f32 %v801, %v815
  %v845 = vxor.u32 %v844, 2147483648
  %v846 = vmul.f32 %v845, 1.442695
  %v847 = vpow.pop %v846
  %v848 = vadd.f32 %v847, 1.0
  %v849 = vrcp.pop %v848
  %v850 = vmul.f32 %v848, %v849
  %v851 = vsub.f32 1.0, %v850
  %v852 = vmul.f32 %v849, %v851
  %v853 = vadd.f32 %v849, %v852
  %vm854 = vweird.f32 %v848
  %vm855 = vweird.f32 %v849
  %vm856 = vmor %vm854, %vm855
  %v857 = vsel %vm856, %v849, %v853
  %v858 = vand.u32 2147483647, %v848
  %vm859 = vcmp.eq.f32.partialorder %v858, 8.507059e+37
  %v860 = vand.u32 %v848, 2147483648
  %v861 = vor.u32 1.1754944e-38, %v860
  %v862 = vsel %vm859, %v861, %v857
  %v863 = vmul.f32 1.0, %v862
  %v864 = vadd.f32 %v802, %v828
  %v865 = vxor.u32 %v864, 2147483648
  %v866 = vmul.f32 %v865, 1.442695
  %v867 = vpow.pop %v866
  %v868 = vadd.f32 %v867, 1.0
  %v869 = vrcp.pop %v868
  %v870 = vmul.f32 %v868, %v869
  %v871 = vsub.f32 1.0, %v870
  %v872 = vmul.f32 %v869, %v871
  %v873 = vadd.f32 %v869, %v872
  %vm874 = vweird.f32 %v868
  %vm875 = vweird.f32 %v869
  %vm876 = vmor %vm874, %vm875
  %v877 = vsel %vm876, %v869, %v873
  %v878 = vand.u32 2147483647, %v868
  %vm879 = vcmp.eq.f32.partialorder %v878, 8.507059e+37
  %v880 = vand.u32 %v868, 2147483648
  %v881 = vor.u32 1.1754944e-38, %v880
  %v882 = vsel %vm879, %v881, %v877
  %v883 = vmul.f32 1.0, %v882
  %v884 = vadd.f32 %v841, %v241
  %v885 = vmul.f32 %v863, %v884
  %v886 = vadd.f32 %v803, %v885
  %v887 = vtanh.pop %v886
  %v888 = vsub.f32 1.0, %v883
  %v889 = vmul.f32 %v888, %v887
  %v890 = vmul.f32 %v883, %v800
  %v891 = vadd.f32 %v889, %v890
  %v892 = vsel %vm283, %v610, %v607
  %v893 = vsel %vm284, %v611, %v608
  %v894 = vsel %vm285, %v612, %v609
  %v895 = vpack.c.bf16 %v891, %v891
  %896 = vmatpush.bf16.msra.mxu0 %v396
  %897 = vmatpush.bf16.msra.mxu0 %v393
  %898 = vmatpush.bf16.msra.mxu0 %v390
  %899 = vmatpush.bf16.msra.mxu0 %v387
  %900 = vmatpush.bf16.msra.mxu0 %v384
  %901 = vmatpush.bf16.msra.mxu0 %v381
  %902 = vmatpush.bf16.msra.mxu0 %v378
  %903 = vmatpush.bf16.msra.mxu0 %v375
  %904 = vmatmul.bf16.gmra.mxu0 %v895
  %v905 = vpop.f32.mrf.mxu0
  %v906 = vadd.f32 0.0, %v905
  %v907 = vpop.f32.mrf.mxu0
  %908 = vdwg.mxu0
  %909 = vmatpush.bf16.msra.mxu0 %v397
  %910 = vmatpush.bf16.msra.mxu0 %v394
  %911 = vmatpush.bf16.msra.mxu0 %v391
  %912 = vmatpush.bf16.msra.mxu0 %v388
  %913 = vmatpush.bf16.msra.mxu0 %v385
  %914 = vmatpush.bf16.msra.mxu0 %v382
  %915 = vmatpush.bf16.msra.mxu0 %v379
  %916 = vmatpush.bf16.msra.mxu0 %v376
  %917 = vmatmul.bf16.gmra.mxu0 %v895
  %v918 = vpop.f32.mrf.mxu0
  %v919 = vadd.f32 0.0, %v918
  %v920 = vpop.f32.mrf.mxu0
  %921 = vdwg.mxu0
  %922 = vmatpush.bf16.msra.mxu0 %v398
  %923 = vmatpush.bf16.msra.mxu0 %v395
  %924 = vmatpush.bf16.msra.mxu0 %v392
  %925 = vmatpush.bf16.msra.mxu0 %v389
  %926 = vmatpush.bf16.msra.mxu0 %v386
  %927 = vmatpush.bf16.msra.mxu0 %v383
  %928 = vmatpush.bf16.msra.mxu0 %v380
  %929 = vmatpush.bf16.msra.mxu0 %v377
  %930 = vmatmul.bf16.gmra.mxu0 %v895
  %v931 = vpop.f32.mrf.mxu0
  %v932 = vadd.f32 0.0, %v931
  %v933 = vpop.f32.mrf.mxu0
  %934 = vdwg.mxu0
  %v935 = vadd.f32 %v892, %v906
  %v936 = vxor.u32 %v935, 2147483648
  %v937 = vmul.f32 %v936, 1.442695
  %v938 = vpow.pop %v937
  %v939 = vadd.f32 %v938, 1.0
  %v940 = vrcp.pop %v939
  %v941 = vmul.f32 %v939, %v940
  %v942 = vsub.f32 1.0, %v941
  %v943 = vmul.f32 %v940, %v942
  %v944 = vadd.f32 %v940, %v943
  %vm945 = vweird.f32 %v939
  %vm946 = vweird.f32 %v940
  %vm947 = vmor %vm945, %vm946
  %v948 = vsel %vm947, %v940, %v944
  %v949 = vand.u32 2147483647, %v939
  %vm950 = vcmp.eq.f32.partialorder %v949, 8.507059e+37
  %v951 = vand.u32 %v939, 2147483648
  %v952 = vor.u32 1.1754944e-38, %v951
  %v953 = vsel %vm950, %v952, %v948
  %v954 = vmul.f32 1.0, %v953
  %v955 = vadd.f32 %v893, %v919
  %v956 = vxor.u32 %v955, 2147483648
  %v957 = vmul.f32 %v956, 1.442695
  %v958 = vpow.pop %v957
  %v959 = vadd.f32 %v958, 1.0
  %v960 = vrcp.pop %v959
  %v961 = vmul.f32 %v959, %v960
  %v962 = vsub.f32 1.0, %v961
  %v963 = vmul.f32 %v960, %v962
  %v964 = vadd.f32 %v960, %v963
  %vm965 = vweird.f32 %v959
  %vm966 = vweird.f32 %v960
  %vm967 = vmor %vm965, %vm966
  %v968 = vsel %vm967, %v960, %v964
  %v969 = vand.u32 2147483647, %v959
  %vm970 = vcmp.eq.f32.partialorder %v969, 8.507059e+37
  %v971 = vand.u32 %v959, 2147483648
  %v972 = vor.u32 1.1754944e-38, %v971
  %v973 = vsel %vm970, %v972, %v968
  %v974 = vmul.f32 1.0, %v973
  %v975 = vadd.f32 %v932, %v241
  %v976 = vmul.f32 %v954, %v975
  %v977 = vadd.f32 %v894, %v976
  %v978 = vtanh.pop %v977
  %v979 = vsub.f32 1.0, %v974
  %v980 = vmul.f32 %v979, %v978
  %v981 = vmul.f32 %v974, %v891
  %v982 = vadd.f32 %v980, %v981
  %v983 = vsel %vm283, %v513, %v510
  %v984 = vsel %vm284, %v514, %v511
  %v985 = vsel %vm285, %v515, %v512
  %v986 = vpack.c.bf16 %v982, %v982
  %987 = vmatpush.bf16.msra.mxu0 %v396
  %988 = vmatpush.bf16.msra.mxu0 %v393
  %989 = vmatpush.bf16.msra.mxu0 %v390
  %990 = vmatpush.bf16.msra.mxu0 %v387
  %991 = vmatpush.bf16.msra.mxu0 %v384
  %992 = vmatpush.bf16.msra.mxu0 %v381
  %993 = vmatpush.bf16.msra.mxu0 %v378
  %994 = vmatpush.bf16.msra.mxu0 %v375
  %995 = vmatmul.bf16.gmra.mxu0 %v986
  %v996 = vpop.f32.mrf.mxu0
  %v997 = vadd.f32 0.0, %v996
  %v998 = vpop.f32.mrf.mxu0
  %999 = vdwg.mxu0
  %1000 = vmatpush.bf16.msra.mxu0 %v397
  %1001 = vmatpush.bf16.msra.mxu0 %v394
  %1002 = vmatpush.bf16.msra.mxu0 %v391
  %1003 = vmatpush.bf16.msra.mxu0 %v388
  %1004 = vmatpush.bf16.msra.mxu0 %v385
  %1005 = vmatpush.bf16.msra.mxu0 %v382
  %1006 = vmatpush.bf16.msra.mxu0 %v379
  %1007 = vmatpush.bf16.msra.mxu0 %v376
  %1008 = vmatmul.bf16.gmra.mxu0 %v986
  %v1009 = vpop.f32.mrf.mxu0
  %v1010 = vadd.f32 0.0, %v1009
  %v1011 = vpop.f32.mrf.mxu0
  %1012 = vdwg.mxu0
  %1013 = vmatpush.bf16.msra.mxu0 %v398
  %1014 = vmatpush.bf16.msra.mxu0 %v395
  %1015 = vmatpush.bf16.msra.mxu0 %v392
  %1016 = vmatpush.bf16.msra.mxu0 %v389
  %1017 = vmatpush.bf16.msra.mxu0 %v386
  %1018 = vmatpush.bf16.msra.mxu0 %v383
  %1019 = vmatpush.bf16.msra.mxu0 %v380
  %1020 = vmatpush.bf16.msra.mxu0 %v377
  %1021 = vmatmul.bf16.gmra.mxu0 %v986
  %v1022 = vpop.f32.mrf.mxu0
  %v1023 = vadd.f32 0.0, %v1022
  %v1024 = vpop.f32.mrf.mxu0
  %1025 = vdwg.mxu0
  %v1026 = vadd.f32 %v983, %v997
  %v1027 = vxor.u32 %v1026, 2147483648
  %v1028 = vmul.f32 %v1027, 1.442695
  %v1029 = vpow.pop %v1028
  %v1030 = vadd.f32 %v1029, 1.0
  %v1031 = vrcp.pop %v1030
  %v1032 = vmul.f32 %v1030, %v1031
  %v1033 = vsub.f32 1.0, %v1032
  %v1034 = vmul.f32 %v1031, %v1033
  %v1035 = vadd.f32 %v1031, %v1034
  %vm1036 = vweird.f32 %v1030
  %vm1037 = vweird.f32 %v1031
  %vm1038 = vmor %vm1036, %vm1037
  %v1039 = vsel %vm1038, %v1031, %v1035
  %v1040 = vand.u32 2147483647, %v1030
  %vm1041 = vcmp.eq.f32.partialorder %v1040, 8.507059e+37
  %v1042 = vand.u32 %v1030, 2147483648
  %v1043 = vor.u32 1.1754944e-38, %v1042
  %v1044 = vsel %vm1041, %v1043, %v1039
  %v1045 = vmul.f32 1.0, %v1044
  %v1046 = vadd.f32 %v984, %v1010
  %v1047 = vxor.u32 %v1046, 2147483648
  %v1048 = vmul.f32 %v1047, 1.442695
  %v1049 = vpow.pop %v1048
  %v1050 = vadd.f32 %v1049, 1.0
  %v1051 = vrcp.pop %v1050
  %v1052 = vmul.f32 %v1050, %v1051
  %v1053 = vsub.f32 1.0, %v1052
  %v1054 = vmul.f32 %v1051, %v1053
  %v1055 = vadd.f32 %v1051, %v1054
  %vm1056 = vweird.f32 %v1050
  %vm1057 = vweird.f32 %v1051
  %vm1058 = vmor %vm1056, %vm1057
  %v1059 = vsel %vm1058, %v1051, %v1055
  %v1060 = vand.u32 2147483647, %v1050
  %vm1061 = vcmp.eq.f32.partialorder %v1060, 8.507059e+37
  %v1062 = vand.u32 %v1050, 2147483648
  %v1063 = vor.u32 1.1754944e-38, %v1062
  %v1064 = vsel %vm1061, %v1063, %v1059
  %v1065 = vmul.f32 1.0, %v1064
  %v1066 = vadd.f32 %v1023, %v241
  %v1067 = vmul.f32 %v1045, %v1066
  %v1068 = vadd.f32 %v985, %v1067
  %v1069 = vtanh.pop %v1068
  %v1070 = vsub.f32 1.0, %v1065
  %v1071 = vmul.f32 %v1070, %v1069
  %v1072 = vmul.f32 %v1065, %v982
  %v1073 = vadd.f32 %v1071, %v1072
  %v1074 = vsel %vm283, %v289, %v286
  %v1075 = vsel %vm284, %v290, %v287
  %v1076 = vsel %vm285, %v291, %v288
  %v1077 = vpack.c.bf16 %v1073, %v1073
  %1078 = vmatpush.bf16.msra.mxu0 %v396
  %1079 = vmatpush.bf16.msra.mxu0 %v393
  %1080 = vmatpush.bf16.msra.mxu0 %v390
  %1081 = vmatpush.bf16.msra.mxu0 %v387
  %1082 = vmatpush.bf16.msra.mxu0 %v384
  %1083 = vmatpush.bf16.msra.mxu0 %v381
  %1084 = vmatpush.bf16.msra.mxu0 %v378
  %1085 = vmatpush.bf16.msra.mxu0 %v375
  %1086 = vmatmul.bf16.gmra.mxu0 %v1077
  %v1087 = vpop.f32.mrf.mxu0
  %v1088 = vadd.f32 0.0, %v1087
  %v1089 = vpop.f32.mrf.mxu0
  %1090 = vdwg.mxu0
  %1091 = vmatpush.bf16.msra.mxu0 %v397
  %1092 = vmatpush.bf16.msra.mxu0 %v394
  %1093 = vmatpush.bf16.msra.mxu0 %v391
  %1094 = vmatpush.bf16.msra.mxu0 %v388
  %1095 = vmatpush.bf16.msra.mxu0 %v385
  %1096 = vmatpush.bf16.msra.mxu0 %v382
  %1097 = vmatpush.bf16.msra.mxu0 %v379
  %1098 = vmatpush.bf16.msra.mxu0 %v376
  %1099 = vmatmul.bf16.gmra.mxu0 %v1077
  %v1100 = vpop.f32.mrf.mxu0
  %v1101 = vadd.f32 0.0, %v1100
  %v1102 = vpop.f32.mrf.mxu0
  %1103 = vdwg.mxu0
  %1104 = vmatpush.bf16.msra.mxu0 %v398
  %1105 = vmatpush.bf16.msra.mxu0 %v395
  %1106 = vmatpush.bf16.msra.mxu0 %v392
  %1107 = vmatpush.bf16.msra.mxu0 %v389
  %1108 = vmatpush.bf16.msra.mxu0 %v386
  %1109 = vmatpush.bf16.msra.mxu0 %v383
  %1110 = vmatpush.bf16.msra.mxu0 %v380
  %1111 = vmatpush.bf16.msra.mxu0 %v377
  %1112 = vmatmul.bf16.gmra.mxu0 %v1077
  %v1113 = vpop.f32.mrf.mxu0
  %v1114 = vadd.f32 0.0, %v1113
  %v1115 = vpop.f32.mrf.mxu0
  %1116 = vdwg.mxu0
  %v1117 = vadd.f32 %v1074, %v1088
  %v1118 = vxor.u32 %v1117, 2147483648
  %v1119 = vmul.f32 %v1118, 1.442695
  %v1120 = vpow.pop %v1119
  %v1121 = vadd.f32 %v1120, 1.0
  %v1122 = vrcp.pop %v1121
  %v1123 = vmul.f32 %v1121, %v1122
  %v1124 = vsub.f32 1.0, %v1123
  %v1125 = vmul.f32 %v1122, %v1124
  %v1126 = vadd.f32 %v1122, %v1125
  %vm1127 = vweird.f32 %v1121
  %vm1128 = vweird.f32 %v1122
  %vm1129 = vmor %vm1127, %vm1128
  %v1130 = vsel %vm1129, %v1122, %v1126
  %v1131 = vand.u32 2147483647, %v1121
  %vm1132 = vcmp.eq.f32.partialorder %v1131, 8.507059e+37
  %v1133 = vand.u32 %v1121, 2147483648
  %v1134 = vor.u32 1.1754944e-38, %v1133
  %v1135 = vsel %vm1132, %v1134, %v1130
  %v1136 = vmul.f32 1.0, %v1135
  %v1137 = vadd.f32 %v1075, %v1101
  %v1138 = vxor.u32 %v1137, 2147483648
  %v1139 = vmul.f32 %v1138, 1.442695
  %v1140 = vpow.pop %v1139
  %v1141 = vadd.f32 %v1140, 1.0
  %v1142 = vrcp.pop %v1141
  %v1143 = vmul.f32 %v1141, %v1142
  %v1144 = vsub.f32 1.0, %v1143
  %v1145 = vmul.f32 %v1142, %v1144
  %v1146 = vadd.f32 %v1142, %v1145
  %vm1147 = vweird.f32 %v1141
  %vm1148 = vweird.f32 %v1142
  %vm1149 = vmor %vm1147, %vm1148
  %v1150 = vsel %vm1149, %v1142, %v1146
  %v1151 = vand.u32 2147483647, %v1141
  %vm1152 = vcmp.eq.f32.partialorder %v1151, 8.507059e+37
  %v1153 = vand.u32 %v1141, 2147483648
  %v1154 = vor.u32 1.1754944e-38, %v1153
  %v1155 = vsel %vm1152, %v1154, %v1150
  %v1156 = vmul.f32 1.0, %v1155
  %v1157 = vadd.f32 %v1114, %v241
  %v1158 = vmul.f32 %v1136, %v1157
  %v1159 = vadd.f32 %v1076, %v1158
  %v1160 = vtanh.pop %v1159
  %v1161 = vsub.f32 1.0, %v1156
  %v1162 = vmul.f32 %v1161, %v1160
  %v1163 = vmul.f32 %v1156, %v1073
  %v1164 = vadd.f32 %v1162, %v1163
  %v1165 = vpack.c.bf16 %v1164, %v1164
  %v1166 = vld [vmem:[%s5] sm:$0xf]
  %v1167 = vld [vmem:[%s5 + $0x4] sm:$0xf]
  %v1168 = vld [vmem:[%s5 + $0x8] sm:$0xf]
  %v1169 = vld [vmem:[%s5 + $0xc] sm:$0xf]
  %v1170 = vld [vmem:[%s5 + $0x10] sm:$0xf]
  %v1171 = vld [vmem:[%s5 + $0x14] sm:$0xf]
  %v1172 = vld [vmem:[%s5 + $0x18] sm:$0xf]
  %v1173 = vld [vmem:[%s5 + $0x1c] sm:$0xf]
  %v1174 = vld [vmem:[%s5 + $0x20] sm:$0xf]
  %v1175 = vld [vmem:[%s5 + $0x24] sm:$0xf]
  %v1176 = vld [vmem:[%s5 + $0x28] sm:$0xf]
  %v1177 = vld [vmem:[%s5 + $0x2c] sm:$0xf]
  %v1178 = vld [vmem:[%s5 + $0x30] sm:$0xf]
  %v1179 = vld [vmem:[%s5 + $0x34] sm:$0xf]
  %v1180 = vld [vmem:[%s5 + $0x38] sm:$0xf]
  %v1181 = vld [vmem:[%s5 + $0x3c] sm:$0xf]
  %v1182 = vld [vmem:[%s6] sm:$0x1]
  %v1184 = vperm.slane %v1182, 0
  %v1202 = vunpack.c.l.b16 %v1166
  %v1203 = vunpack.c.l.b16 %v1167
  %v1204 = vunpack.c.l.b16 %v1168
  %v1205 = vunpack.c.l.b16 %v1169
  %v1206 = vunpack.c.l.b16 %v1170
  %v1207 = vunpack.c.l.b16 %v1171
  %v1208 = vunpack.c.l.b16 %v1172
  %v1209 = vunpack.c.l.b16 %v1173
  %v1210 = vunpack.c.l.b16 %v1174
  %v1211 = vunpack.c.l.b16 %v1175
  %v1212 = vunpack.c.l.b16 %v1176
  %v1213 = vunpack.c.l.b16 %v1177
  %v1214 = vunpack.c.l.b16 %v1178
  %v1215 = vunpack.c.l.b16 %v1179
  %v1216 = vunpack.c.l.b16 %v1180
  %v1217 = vunpack.c.l.b16 %v1181
  %v1218 = vpack.c.b16 %v1203, %v1202
  %v1219 = vpack.c.b16 %v1205, %v1204
  %v1220 = vpack.c.b16 %v1207, %v1206
  %v1221 = vpack.c.b16 %v1209, %v1208
  %v1222 = vpack.c.b16 %v1211, %v1210
  %v1223 = vpack.c.b16 %v1213, %v1212
  %v1224 = vpack.c.b16 %v1215, %v1214
  %v1225 = vpack.c.b16 %v1217, %v1216
  %1234 = vmatpush.bf16.msra.mxu0 %v1225
  %1235 = vmatpush.bf16.msra.mxu0 %v1224
  %1236 = vmatpush.bf16.msra.mxu0 %v1223
  %1237 = vmatpush.bf16.msra.mxu0 %v1222
  %1238 = vmatpush.bf16.msra.mxu0 %v1221
  %1239 = vmatpush.bf16.msra.mxu0 %v1220
  %1240 = vmatpush.bf16.msra.mxu0 %v1219
  %1241 = vmatpush.bf16.msra.mxu0 %v1218
  %1242 = vmatmul.bf16.gmra.mxu0 %v1165
  %v1243 = vpop.f32.mrf.mxu0
  %v1244 = vadd.f32 %v1184, %v1243
  %v1245 = vpop.f32.mrf.mxu0
  %1246 = vdwg.mxu0
  %1247 = vst [vmem:[%s7] sm:$0xff] %v1244
  // Predicated region
  $region30: #{rnn_classifier_forward.1} parent=0 // pred_check
    _
  $region31: #{rnn_classifier_forward.1} parent=0 // pred_check_branch
    %1249 = sbr.rel (0) target = $region33
  $region32: #{rnn_classifier_forward.1} parent=0 // pred_region
    _
  $region33: #{rnn_classifier_forward.1} parent=0 // pred_fallthru
    _
  // Predicated region
  $region34: #{rnn_classifier_forward.1} parent=0 // pred_check
    _
  $region35: #{rnn_classifier_forward.1} parent=0 // pred_check_branch
    %1251 = sbr.rel (0) target = $region37
  $region36: #{rnn_classifier_forward.1} parent=0 // pred_region
    _
  $region37: #{rnn_classifier_forward.1} parent=0 // pred_fallthru
    _

</llo_original>
